<compile_context>
chip_gen: v5e
topology: v5e:2x2
jax: 0.10.0
libtpu: 0.0.40
codegen_flags: <defaults>
</compile_context>

<pallas_src>
import jax
import jax.numpy as jnp
from jax.experimental import pallas as pl
from jax.experimental.pallas import tpu as pltpu

# ---- model hyper-parameters (small, synthetic) ----
B = 2
C_IN = 3            # RGB input channels (what an EfficientNet stem expects)
H = W = 16
K_RAW = 9 * C_IN    # 27 im2col taps*channels
K_PAD = 128         # lane-padded K for the stem matmul
STEM_CH = 32        # stand-in conv-stem width (valid columns)
STEM_PAD = 128      # lane-padded stem width
IN_CH = 128         # stand-in for enet.classifier.in_features (1280 in b0)
FC_DIM = 512        # hard-coded nn.Linear(in_ch, 512) in the PyTorch module
OUT_DIM = 8
OUT_PAD = 128       # lane-padded class dim (valid: first OUT_DIM columns)
SUBCENTERS = 3      # ArcMarginProduct_subcenter default k
DROP_NUMS = 1

_VMEM = pl.BlockSpec(memory_space=pltpu.MemorySpace.VMEM)


def _swish(x):
    # Swish_module: x * sigmoid(x)
    return x * jax.nn.sigmoid(x)


# ----------------------------------------------------------------------------
# Shared backbone: conv stem (im2col matmul) + swish + global-avg-pool (matmul
# with averaging matrix) + head projection + swish.  Everything stays in VMEM.
# ----------------------------------------------------------------------------
def _backbone(p_ref, avg_ref, cw_ref, cb_ref, hw_ref, hb_ref):
    # p_ref: (B*H*W, K_PAD)  avg_ref: (B, B*H*W)
    # cw_ref: (K_PAD, STEM_PAD)  cb_ref: (1, STEM_PAD)
    # hw_ref: (STEM_PAD, IN_CH)  hb_ref: (1, IN_CH)
    acc = jnp.dot(p_ref[...], cw_ref[...], preferred_element_type=jnp.float32)
    acc = _swish(acc + cb_ref[...])                          # (BHW, STEM_PAD)
    pooled = jnp.dot(avg_ref[...], acc,
                     preferred_element_type=jnp.float32)     # (B, STEM_PAD)
    feat = jnp.dot(pooled, hw_ref[...],
                   preferred_element_type=jnp.float32) + hb_ref[...]
    return _swish(feat)                                      # (B, IN_CH)


# ----------------------------------------------------------------------------
# Fused kernel, classify branch (multi-dropout averaged linear head)
# ----------------------------------------------------------------------------
def fused_classify_kernel(p_ref, avg_ref, cw_ref, cb_ref, hw_ref, hb_ref,
                          clw_ref, clb_ref, o_ref):
    feat = _backbone(p_ref, avg_ref, cw_ref, cb_ref, hw_ref, hb_ref)
    # nn.Dropout(0.5) is identity in eval mode, so all DROP_NUMS terms are
    # identical and the averaged sum is exactly one matmul + bias.
    # TODO(synk): training-mode Bernoulli(0.5) masks (pltpu.prng_*) not applied.
    o_ref[...] = (jnp.dot(feat, clw_ref[...],
                          preferred_element_type=jnp.float32) + clb_ref[...])


# ----------------------------------------------------------------------------
# Fused kernel, metric branch: fc -> Swish -> ArcMarginProduct_subcenter
# ----------------------------------------------------------------------------
def fused_metric_kernel(p_ref, avg_ref, cw_ref, cb_ref, hw_ref, hb_ref,
                        fcw_ref, fcb_ref, arcw_ref, o_ref):
    """arcw_ref: (FC_DIM, SUBCENTERS*OUT_PAD).  Column s*OUT_PAD + c holds the
       L2-normalized weight row of (class c, subcenter s); columns with
       c >= OUT_DIM are zero.  Subcenter max is then a max over three
       lane-aligned 128-wide slices."""
    feat = _backbone(p_ref, avg_ref, cw_ref, cb_ref, hw_ref, hb_ref)
    h = jnp.dot(feat, fcw_ref[...],
                preferred_element_type=jnp.float32) + fcb_ref[...]
    h = _swish(h)                                            # (B, FC_DIM)
    # F.normalize(h, dim=-1): x / max(||x||_2, 1e-12)  ==  x * rsqrt(max(||x||^2, 1e-24))
    sumsq = jnp.sum(h * h, axis=-1, keepdims=True)
    hn = h * jax.lax.rsqrt(jnp.maximum(sumsq, 1e-24))
    cos = jnp.dot(hn, arcw_ref[...],
                  preferred_element_type=jnp.float32)        # (B, SUBCENTERS*OUT_PAD)
    out = cos[:, 0:OUT_PAD]
    for s in range(1, SUBCENTERS):                           # static, lane-aligned slices
        out = jnp.maximum(out, cos[:, s * OUT_PAD:(s + 1) * OUT_PAD])
    o_ref[...] = out


# ----------------------------------------------------------------------------
# Glue: parameter init (pre-padded, lane-dense), im2col, forward wrapper
# ----------------------------------------------------------------------------
def init_params(key):
    ks = jax.random.split(key, 8)

    def lin(k, fan_in, shape):
        return jax.random.uniform(k, shape, jnp.float32, -1.0, 1.0) / jnp.sqrt(fan_in)

    p = {}
    # conv stem: (K_RAW, STEM_CH) zero-padded to (K_PAD, STEM_PAD)
    conv_w = lin(ks[0], K_RAW, (K_RAW, STEM_CH))
    p["conv_w"] = jnp.zeros((K_PAD, STEM_PAD), jnp.float32).at[:K_RAW, :STEM_CH].set(conv_w)
    p["conv_b"] = jnp.zeros((1, STEM_PAD), jnp.float32)
    # backbone head: (STEM_CH, IN_CH) zero-padded rows to STEM_PAD
    head_w = lin(ks[1], STEM_CH, (STEM_CH, IN_CH))
    p["head_w"] = jnp.zeros((STEM_PAD, IN_CH), jnp.float32).at[:STEM_CH, :].set(head_w)
    p["head_b"] = lin(ks[2], STEM_CH, (1, IN_CH))
    # nn.Linear(in_ch, 512), stored transposed (in, out)
    p["fc_w"] = lin(ks[3], IN_CH, (IN_CH, FC_DIM))
    p["fc_b"] = lin(ks[4], IN_CH, (1, FC_DIM))
    # ArcMarginProduct_subcenter weight: (OUT_DIM*SUBCENTERS, FC_DIM), rows
    # ordered class-major (row = c*SUBCENTERS + s), L2-normalized, then laid out
    # subcenter-block-major with the class dim padded to OUT_PAD lanes.
    arc = jax.random.uniform(ks[5], (OUT_DIM * SUBCENTERS, FC_DIM),
                             jnp.float32, -1.0, 1.0) / jnp.sqrt(FC_DIM)
    arc = arc / jnp.maximum(jnp.linalg.norm(arc, axis=-1, keepdims=True), 1e-12)
    arc = arc.reshape(OUT_DIM, SUBCENTERS, FC_DIM).transpose(1, 0, 2)  # (S, C, FC)
    arc = jnp.pad(arc, ((0, 0), (0, OUT_PAD - OUT_DIM), (0, 0)))       # (S, 128, FC)
    p["arc_w_t"] = arc.reshape(SUBCENTERS * OUT_PAD, FC_DIM).T         # (FC, S*128)
    # classify head: (IN_CH, OUT_DIM) zero-padded to (IN_CH, OUT_PAD)
    cls_w = lin(ks[6], IN_CH, (IN_CH, OUT_DIM))
    p["cls_w"] = jnp.zeros((IN_CH, OUT_PAD), jnp.float32).at[:, :OUT_DIM].set(cls_w)
    cls_b = lin(ks[7], IN_CH, (1, OUT_DIM))
    p["cls_b"] = jnp.zeros((1, OUT_PAD), jnp.float32).at[:, :OUT_DIM].set(cls_b)
    return p


def _im2col_3x3_padded(x_nhwc):
    """'same' 3x3 patches, (dy, dx, c) ordering -> (B*H*W, K_PAD) zero-padded."""
    b, h, w, c = x_nhwc.shape
    xp = jnp.pad(x_nhwc, ((0, 0), (1, 1), (1, 1), (0, 0)))
    cols = [xp[:, dy:dy + h, dx:dx + w, :] for dy in range(3) for dx in range(3)]
    patches = jnp.concatenate(cols, axis=-1).reshape(b * h * w, 9 * c)
    return jnp.pad(patches, ((0, 0), (0, K_PAD - 9 * c)))


def effnet_forward(x_nchw, p, metric_strategy=False):
    nb, _, h, w = x_nchw.shape
    x = jnp.transpose(x_nchw.astype(jnp.float32), (0, 2, 3, 1))   # NCHW -> NHWC
    patches = _im2col_3x3_padded(x)                               # (nb*h*w, K_PAD)
    # per-batch global-average-pool as a matmul: (nb, nb*h*w) block matrix / hw
    avg_mat = jnp.repeat(jnp.eye(nb, dtype=jnp.float32), h * w, axis=1) / float(h * w)

    if metric_strategy:
        out_pad = pl.pallas_call(
            fused_metric_kernel,
            out_shape=jax.ShapeDtypeStruct((nb, OUT_PAD), jnp.float32),
            in_specs=[_VMEM] * 9,
            out_specs=_VMEM,
        )(patches, avg_mat, p["conv_w"], p["conv_b"], p["head_w"], p["head_b"],
          p["fc_w"], p["fc_b"], p["arc_w_t"])
    else:
        out_pad = pl.pallas_call(
            fused_classify_kernel,
            out_shape=jax.ShapeDtypeStruct((nb, OUT_PAD), jnp.float32),
            in_specs=[_VMEM] * 8,
            out_specs=_VMEM,
        )(patches, avg_mat, p["conv_w"], p["conv_b"], p["head_w"], p["head_b"],
          p["cls_w"], p["cls_b"])
    return out_pad[:, :OUT_DIM]


if __name__ == "__main__":
    key = jax.random.PRNGKey(0)
    kx, kp = jax.random.split(key)
    x = jax.random.normal(kx, (B, C_IN, H, W), jnp.float32)
    params = init_params(kp)

    out = effnet_forward(x, params, metric_strategy=False)        # default branch
    out_metric = effnet_forward(x, params, metric_strategy=True)  # arc-margin branch
    jax.block_until_ready((out, out_metric))

    assert out.shape == (B, OUT_DIM)
    assert out_metric.shape == (B, OUT_DIM)
    assert bool(jnp.all(jnp.isfinite(out))) and bool(jnp.all(jnp.isfinite(out_metric)))
    print("KERNEL_OK")
</pallas_src>

<mosaic_0001>
module attributes {stable_mosaic.version = 11 : i64} {
  func.func @fused_classify_kernel(%arg0: memref<512x128xf32, #tpu.memory_space<vmem>>, %arg1: memref<2x512xf32, #tpu.memory_space<vmem>>, %arg2: memref<128x128xf32, #tpu.memory_space<vmem>>, %arg3: memref<1x128xf32, #tpu.memory_space<vmem>>, %arg4: memref<128x128xf32, #tpu.memory_space<vmem>>, %arg5: memref<1x128xf32, #tpu.memory_space<vmem>>, %arg6: memref<128x128xf32, #tpu.memory_space<vmem>>, %arg7: memref<1x128xf32, #tpu.memory_space<vmem>>, %arg8: memref<2x128xf32, #tpu.memory_space<vmem>>) attributes {dimension_semantics = [], scalar_prefetch = 0 : i64, scratch_operands = 0 : i64, tpu.core_type = #tpu.core_type<tc>} {
    %c0 = arith.constant 0 : index
    %c0_0 = arith.constant 0 : index
    %0 = vector.load %arg0[%c0, %c0_0] : memref<512x128xf32, #tpu.memory_space<vmem>>, vector<512x128xf32>
    %c0_1 = arith.constant 0 : index
    %c0_2 = arith.constant 0 : index
    %1 = vector.load %arg2[%c0_1, %c0_2] : memref<128x128xf32, #tpu.memory_space<vmem>>, vector<128x128xf32>
    %cst = arith.constant dense<0.000000e+00> : vector<512x128xf32>
    %2 = tpu.matmul %0, %1, %cst {dimension_numbers = #tpu.dot_dimension_numbers<[1], [0], [0], [1], [0, 0, 1, 1], [], []>} : vector<512x128xf32>, vector<128x128xf32>, vector<512x128xf32> -> vector<512x128xf32>
    %c0_3 = arith.constant 0 : index
    %c0_4 = arith.constant 0 : index
    %3 = vector.load %arg3[%c0_3, %c0_4] : memref<1x128xf32, #tpu.memory_space<vmem>>, vector<1x128xf32>
    %4 = vector.broadcast %3 : vector<1x128xf32> to vector<512x128xf32>
    %5 = arith.addf %2, %4 : vector<512x128xf32>
    %6 = arith.negf %5 : vector<512x128xf32>
    %7 = math.exp %6 : vector<512x128xf32>
    %cst_5 = arith.constant 1.000000e+00 : f32
    %8 = vector.broadcast %cst_5 : f32 to vector<512x128xf32>
    %9 = arith.addf %8, %7 : vector<512x128xf32>
    %10 = arith.divf %8, %9 : vector<512x128xf32>
    %11 = arith.mulf %5, %10 : vector<512x128xf32>
    %c0_6 = arith.constant 0 : index
    %c0_7 = arith.constant 0 : index
    %12 = vector.load %arg1[%c0_6, %c0_7] : memref<2x512xf32, #tpu.memory_space<vmem>>, vector<2x512xf32>
    %cst_8 = arith.constant dense<0.000000e+00> : vector<2x128xf32>
    %13 = tpu.matmul %12, %11, %cst_8 {dimension_numbers = #tpu.dot_dimension_numbers<[1], [0], [0], [1], [0, 0, 1, 1], [], []>} : vector<2x512xf32>, vector<512x128xf32>, vector<2x128xf32> -> vector<2x128xf32>
    %c0_9 = arith.constant 0 : index
    %c0_10 = arith.constant 0 : index
    %14 = vector.load %arg4[%c0_9, %c0_10] : memref<128x128xf32, #tpu.memory_space<vmem>>, vector<128x128xf32>
    %cst_11 = arith.constant dense<0.000000e+00> : vector<2x128xf32>
    %15 = tpu.matmul %13, %14, %cst_11 {dimension_numbers = #tpu.dot_dimension_numbers<[1], [0], [0], [1], [0, 0, 1, 1], [], []>} : vector<2x128xf32>, vector<128x128xf32>, vector<2x128xf32> -> vector<2x128xf32>
    %c0_12 = arith.constant 0 : index
    %c0_13 = arith.constant 0 : index
    %16 = vector.load %arg5[%c0_12, %c0_13] : memref<1x128xf32, #tpu.memory_space<vmem>>, vector<1x128xf32>
    %17 = vector.broadcast %16 : vector<1x128xf32> to vector<2x128xf32>
    %18 = arith.addf %15, %17 : vector<2x128xf32>
    %19 = arith.negf %18 : vector<2x128xf32>
    %20 = math.exp %19 : vector<2x128xf32>
    %cst_14 = arith.constant 1.000000e+00 : f32
    %21 = vector.broadcast %cst_14 : f32 to vector<2x128xf32>
    %22 = arith.addf %21, %20 : vector<2x128xf32>
    %23 = arith.divf %21, %22 : vector<2x128xf32>
    %24 = arith.mulf %18, %23 : vector<2x128xf32>
    %c0_15 = arith.constant 0 : index
    %c0_16 = arith.constant 0 : index
    %25 = vector.load %arg6[%c0_15, %c0_16] : memref<128x128xf32, #tpu.memory_space<vmem>>, vector<128x128xf32>
    %cst_17 = arith.constant dense<0.000000e+00> : vector<2x128xf32>
    %26 = tpu.matmul %24, %25, %cst_17 {dimension_numbers = #tpu.dot_dimension_numbers<[1], [0], [0], [1], [0, 0, 1, 1], [], []>} : vector<2x128xf32>, vector<128x128xf32>, vector<2x128xf32> -> vector<2x128xf32>
    %c0_18 = arith.constant 0 : index
    %c0_19 = arith.constant 0 : index
    %27 = vector.load %arg7[%c0_18, %c0_19] : memref<1x128xf32, #tpu.memory_space<vmem>>, vector<1x128xf32>
    %28 = vector.broadcast %27 : vector<1x128xf32> to vector<2x128xf32>
    %29 = arith.addf %26, %28 : vector<2x128xf32>
    %c0_20 = arith.constant 0 : index
    %c0_21 = arith.constant 0 : index
    %30 = vector.load %arg8[%c0_20, %c0_21] : memref<2x128xf32, #tpu.memory_space<vmem>>, vector<2x128xf32>
    tpu.vector_store %arg8[%c0_20, %c0_21], %29 {strides = array<i32>} : memref<2x128xf32, #tpu.memory_space<vmem>>, vector<2x128xf32>,
    return
  }
}

</mosaic_0001>

<llo_original>
// kernel: tpu_custom_call.1
$region0: #{tpu_custom_call.1}
  #allocation0 [shape = 'u32[]', space=smem, size = 0x4, offset = 0x4, fixed_abs, tag = 'smem constant byte address 0x4 - core index']
  #allocation1 [shape = 'u32[72,128]{1,0:T(1,128)}', space=vmem, size = 0x9000, scoped, tag = 'internal scratch']
  %s0 = inlined_call_operand.hbm [shape: f32[512,128], index: 0, kind: input, shape index: {}]
  %s1 = inlined_call_operand.hbm [shape: f32[2,512], index: 1, kind: input, shape index: {}]
  %s2 = inlined_call_operand.hbm [shape: f32[128,128], index: 2, kind: input, shape index: {}]
  %s3 = inlined_call_operand.vmem [shape: f32[1,128], index: 3, kind: input, shape index: {}]
  %s4 = inlined_call_operand.hbm [shape: f32[128,128], index: 4, kind: input, shape index: {}]
  %s5 = inlined_call_operand.vmem [shape: f32[1,128], index: 5, kind: input, shape index: {}]
  %s6 = inlined_call_operand.hbm [shape: f32[128,128], index: 6, kind: input, shape index: {}]
  %s7 = inlined_call_operand.vmem [shape: f32[1,128], index: 7, kind: input, shape index: {}]
  %s8 = inlined_call_operand.hbm [shape: f32[2,128], index: 8, kind: output, shape index: {}]
  %s9 = sld [smem:[#allocation0]]
  $region62: #{tpu_custom_call.1} parent=0
    _
  %s11 = ssub.s32 1, %s9
  %s12 = scalar_select 0, %s11, %s9
  $region1: #{tpu_custom_call.1} parent=0
    #allocation2 [shape = 'u8[262144]{0}', space=vmem, size = 0x40000, scoped, tag = 'input window, operand 0, single buffered']
    #allocation3 [shape = 's32[1]{0}', space=sflag, size = 0x4, scoped, tag = 'scoped memory for tpu_custom_call.1']
    #allocation4 [shape = 's32[1]{0}', space=sflag, size = 0x4, scoped, tag = 'scoped memory for tpu_custom_call.1']
    #allocation5 [shape = 'u8[4096]{0}', space=vmem, size = 0x1000, scoped, tag = 'input window, operand 1, single buffered']
    #allocation6 [shape = 's32[1]{0}', space=sflag, size = 0x4, scoped, tag = 'scoped memory for tpu_custom_call.1']
    #allocation7 [shape = 'u8[65536]{0}', space=vmem, size = 0x10000, scoped, tag = 'input window, operand 2, single buffered']
    #allocation8 [shape = 'u8[65536]{0}', space=vmem, size = 0x10000, scoped, tag = 'input window, operand 4, single buffered']
    #allocation9 [shape = 's32[1]{0}', space=sflag, size = 0x4, scoped, tag = 'scoped memory for tpu_custom_call.1']
    #allocation10 [shape = 'u8[65536]{0}', space=vmem, size = 0x10000, scoped, tag = 'input window, operand 6, single buffered']
    #allocation11 [shape = 'u8[1024]{0}', space=vmem, size = 0x400, scoped, tag = 'output window, operand 0, single buffered']
    %13 = vsyncpa [#allocation3], 0
    %14 = vsyncpa [#allocation6], 0
    %15 = vsyncpa [#allocation9], 0
    %16 = vsyncpa [#allocation4], 0
    // Predicated region
    $region2: #{tpu_custom_call.1} parent=1 // pred_check
      _
    $region3: #{tpu_custom_call.1} parent=1 // pred_check_branch
      %18 = sbr.rel (0) target = $region5
    $region4: #{tpu_custom_call.1} parent=1 // pred_region
      %20 = vsyncadd [#allocation3], 0
      %s21 = sshll.u32 %s0, 4
      %s22 = int_to_ptr.hbm [resolvable:$true] %s21
      %s23 = sshll.u32 [#allocation2], 4
      %s24 = int_to_ptr.vmem [resolvable:$true] %s23
      %29 = dma.hbm_to_vmem [thread:$0]  %s22, 8192, %s24, [#allocation3], 128, 128, 8
    $region5: #{tpu_custom_call.1} parent=1 // pred_fallthru
      _
    // Predicated region
    $region6: #{tpu_custom_call.1} parent=1 // pred_check
      _
    $region7: #{tpu_custom_call.1} parent=1 // pred_check_branch
      %31 = sbr.rel (0) target = $region9
    $region8: #{tpu_custom_call.1} parent=1 // pred_region
      %33 = vsyncadd [#allocation6], 0
      %s35 = sshll.u32 %s1, 4
      %s36 = int_to_ptr.hbm [resolvable:$true] %s35
      %s37 = sshll.u32 [#allocation5], 4
      %s38 = int_to_ptr.vmem [resolvable:$true] %s37
      %40 = dma.hbm_to_vmem [thread:$0]  %s36, 128, %s38, [#allocation6]
    $region9: #{tpu_custom_call.1} parent=1 // pred_fallthru
      _
    // Predicated region
    $region10: #{tpu_custom_call.1} parent=1 // pred_check
      _
    $region11: #{tpu_custom_call.1} parent=1 // pred_check_branch
      %42 = sbr.rel (0) target = $region13
    $region12: #{tpu_custom_call.1} parent=1 // pred_region
      %44 = vsyncadd [#allocation6], 0
      %s45 = sshll.u32 %s2, 4
      %s46 = int_to_ptr.hbm [resolvable:$true] %s45
      %s47 = sshll.u32 [#allocation7], 4
      %s48 = int_to_ptr.vmem [resolvable:$true] %s47
      %53 = dma.hbm_to_vmem [thread:$0]  %s46, 2048, %s48, [#allocation6], 128, 128, 8
    $region13: #{tpu_custom_call.1} parent=1 // pred_fallthru
      _
    // Predicated region
    $region14: #{tpu_custom_call.1} parent=1 // pred_check
      _
    $region15: #{tpu_custom_call.1} parent=1 // pred_check_branch
      %55 = sbr.rel (0) target = $region17
    $region16: #{tpu_custom_call.1} parent=1 // pred_region
      _
    $region17: #{tpu_custom_call.1} parent=1 // pred_fallthru
      _
    // Predicated region
    $region18: #{tpu_custom_call.1} parent=1 // pred_check
      _
    $region19: #{tpu_custom_call.1} parent=1 // pred_check_branch
      %57 = sbr.rel (0) target = $region21
    $region20: #{tpu_custom_call.1} parent=1 // pred_region
      %59 = vsyncadd [#allocation9], 0
      %s60 = sshll.u32 %s4, 4
      %s61 = int_to_ptr.hbm [resolvable:$true] %s60
      %s62 = sshll.u32 [#allocation8], 4
      %s63 = int_to_ptr.vmem [resolvable:$true] %s62
      %68 = dma.hbm_to_vmem [thread:$0]  %s61, 2048, %s63, [#allocation9], 128, 128, 8
    $region21: #{tpu_custom_call.1} parent=1 // pred_fallthru
      _
    // Predicated region
    $region22: #{tpu_custom_call.1} parent=1 // pred_check
      _
    $region23: #{tpu_custom_call.1} parent=1 // pred_check_branch
      %70 = sbr.rel (0) target = $region25
    $region24: #{tpu_custom_call.1} parent=1 // pred_region
      _
    $region25: #{tpu_custom_call.1} parent=1 // pred_fallthru
      _
    // Predicated region
    $region26: #{tpu_custom_call.1} parent=1 // pred_check
      _
    $region27: #{tpu_custom_call.1} parent=1 // pred_check_branch
      %72 = sbr.rel (0) target = $region29
    $region28: #{tpu_custom_call.1} parent=1 // pred_region
      %74 = vsyncadd [#allocation9], 0
      %s75 = sshll.u32 %s6, 4
      %s76 = int_to_ptr.hbm [resolvable:$true] %s75
      %s77 = sshll.u32 [#allocation10], 4
      %s78 = int_to_ptr.vmem [resolvable:$true] %s77
      %83 = dma.hbm_to_vmem [thread:$0]  %s76, 2048, %s78, [#allocation9], 128, 128, 8
    $region29: #{tpu_custom_call.1} parent=1 // pred_fallthru
      _
    // Predicated region
    $region30: #{tpu_custom_call.1} parent=1 // pred_check
      _
    $region31: #{tpu_custom_call.1} parent=1 // pred_check_branch
      %85 = sbr.rel (0) target = $region33
    $region32: #{tpu_custom_call.1} parent=1 // pred_region
      _
    $region33: #{tpu_custom_call.1} parent=1 // pred_fallthru
      _
    // Predicated region
    $region34: #{tpu_custom_call.1} parent=1 // pred_check
      _
    $region35: #{tpu_custom_call.1} parent=1 // pred_check_branch
      %87 = sbr.rel (0) target = $region37
    $region36: #{tpu_custom_call.1} parent=1 // pred_region
      %89 = dma.done [#allocation3], 8192
    $region37: #{tpu_custom_call.1} parent=1 // pred_fallthru
      _
    // Predicated region
    $region38: #{tpu_custom_call.1} parent=1 // pred_check
      _
    $region39: #{tpu_custom_call.1} parent=1 // pred_check_branch
      %91 = sbr.rel (0) target = $region41
    $region40: #{tpu_custom_call.1} parent=1 // pred_region
      %93 = dma.done [#allocation6], 128
    $region41: #{tpu_custom_call.1} parent=1 // pred_fallthru
      _
    // Predicated region
    $region42: #{tpu_custom_call.1} parent=1 // pred_check
      _
    $region43: #{tpu_custom_call.1} parent=1 // pred_check_branch
      %95 = sbr.rel (0) target = $region45
    $region44: #{tpu_custom_call.1} parent=1 // pred_region
      %97 = dma.done [#allocation6], 2048
    $region45: #{tpu_custom_call.1} parent=1 // pred_fallthru
      _
    // Predicated region
    $region46: #{tpu_custom_call.1} parent=1 // pred_check
      _
    $region47: #{tpu_custom_call.1} parent=1 // pred_check_branch
      %99 = sbr.rel (0) target = $region49
    $region48: #{tpu_custom_call.1} parent=1 // pred_region
      %101 = dma.done [#allocation9], 2048
    $region49: #{tpu_custom_call.1} parent=1 // pred_fallthru
      _
    // Predicated region
    $region50: #{tpu_custom_call.1} parent=1 // pred_check
      _
    $region51: #{tpu_custom_call.1} parent=1 // pred_check_branch
      %103 = sbr.rel (0) target = $region53
    $region52: #{tpu_custom_call.1} parent=1 // pred_region
      %105 = dma.done [#allocation9], 2048
    $region53: #{tpu_custom_call.1} parent=1 // pred_fallthru
      _
    %v106 = vld [vmem:[#allocation2] sm:$0xff]
    %v107 = vld [vmem:[#allocation2 + $0x8] sm:$0xff]
    %v108 = vld [vmem:[#allocation2 + $0x10] sm:$0xff]
    %v109 = vld [vmem:[#allocation2 + $0x18] sm:$0xff]
    %v110 = vld [vmem:[#allocation2 + $0x20] sm:$0xff]
    %v111 = vld [vmem:[#allocation2 + $0x28] sm:$0xff]
    %v112 = vld [vmem:[#allocation2 + $0x30] sm:$0xff]
    %v113 = vld [vmem:[#allocation2 + $0x38] sm:$0xff]
    %v114 = vld [vmem:[#allocation2 + $0x40] sm:$0xff]
    %v115 = vld [vmem:[#allocation2 + $0x48] sm:$0xff]
    %v116 = vld [vmem:[#allocation2 + $0x50] sm:$0xff]
    %v117 = vld [vmem:[#allocation2 + $0x58] sm:$0xff]
    %v118 = vld [vmem:[#allocation2 + $0x60] sm:$0xff]
    %v119 = vld [vmem:[#allocation2 + $0x68] sm:$0xff]
    %v120 = vld [vmem:[#allocation2 + $0x70] sm:$0xff]
    %v121 = vld [vmem:[#allocation2 + $0x78] sm:$0xff]
    %v122 = vld [vmem:[#allocation2 + $0x80] sm:$0xff]
    %v123 = vld [vmem:[#allocation2 + $0x88] sm:$0xff]
    %v124 = vld [vmem:[#allocation2 + $0x90] sm:$0xff]
    %v125 = vld [vmem:[#allocation2 + $0x98] sm:$0xff]
    %v126 = vld [vmem:[#allocation2 + $0xa0] sm:$0xff]
    %v127 = vld [vmem:[#allocation2 + $0xa8] sm:$0xff]
    %v128 = vld [vmem:[#allocation2 + $0xb0] sm:$0xff]
    %v129 = vld [vmem:[#allocation2 + $0xb8] sm:$0xff]
    %v130 = vld [vmem:[#allocation2 + $0xc0] sm:$0xff]
    %v131 = vld [vmem:[#allocation2 + $0xc8] sm:$0xff]
    %v132 = vld [vmem:[#allocation2 + $0xd0] sm:$0xff]
    %v133 = vld [vmem:[#allocation2 + $0xd8] sm:$0xff]
    %v134 = vld [vmem:[#allocation2 + $0xe0] sm:$0xff]
    %v135 = vld [vmem:[#allocation2 + $0xe8] sm:$0xff]
    %v136 = vld [vmem:[#allocation2 + $0xf0] sm:$0xff]
    %v137 = vld [vmem:[#allocation2 + $0xf8] sm:$0xff]
    %v138 = vld [vmem:[#allocation2 + $0x100] sm:$0xff]
    %v139 = vld [vmem:[#allocation2 + $0x108] sm:$0xff]
    %v140 = vld [vmem:[#allocation2 + $0x110] sm:$0xff]
    %v141 = vld [vmem:[#allocation2 + $0x118] sm:$0xff]
    %v142 = vld [vmem:[#allocation2 + $0x120] sm:$0xff]
    %v143 = vld [vmem:[#allocation2 + $0x128] sm:$0xff]
    %v144 = vld [vmem:[#allocation2 + $0x130] sm:$0xff]
    %v145 = vld [vmem:[#allocation2 + $0x138] sm:$0xff]
    %v146 = vld [vmem:[#allocation2 + $0x140] sm:$0xff]
    %v147 = vld [vmem:[#allocation2 + $0x148] sm:$0xff]
    %v148 = vld [vmem:[#allocation2 + $0x150] sm:$0xff]
    %v149 = vld [vmem:[#allocation2 + $0x158] sm:$0xff]
    %v150 = vld [vmem:[#allocation2 + $0x160] sm:$0xff]
    %v151 = vld [vmem:[#allocation2 + $0x168] sm:$0xff]
    %v152 = vld [vmem:[#allocation2 + $0x170] sm:$0xff]
    %v153 = vld [vmem:[#allocation2 + $0x178] sm:$0xff]
    %v154 = vld [vmem:[#allocation2 + $0x180] sm:$0xff]
    %v155 = vld [vmem:[#allocation2 + $0x188] sm:$0xff]
    %v156 = vld [vmem:[#allocation2 + $0x190] sm:$0xff]
    %v157 = vld [vmem:[#allocation2 + $0x198] sm:$0xff]
    %v158 = vld [vmem:[#allocation2 + $0x1a0] sm:$0xff]
    %v159 = vld [vmem:[#allocation2 + $0x1a8] sm:$0xff]
    %v160 = vld [vmem:[#allocation2 + $0x1b0] sm:$0xff]
    %v161 = vld [vmem:[#allocation2 + $0x1b8] sm:$0xff]
    %v162 = vld [vmem:[#allocation2 + $0x1c0] sm:$0xff]
    %v163 = vld [vmem:[#allocation2 + $0x1c8] sm:$0xff]
    %v164 = vld [vmem:[#allocation2 + $0x1d0] sm:$0xff]
    %v165 = vld [vmem:[#allocation2 + $0x1d8] sm:$0xff]
    %v166 = vld [vmem:[#allocation2 + $0x1e0] sm:$0xff]
    %v167 = vld [vmem:[#allocation2 + $0x1e8] sm:$0xff]
    %v168 = vld [vmem:[#allocation2 + $0x1f0] sm:$0xff]
    %v169 = vld [vmem:[#allocation2 + $0x1f8] sm:$0xff]
    %v170 = vld [vmem:[#allocation7] sm:$0xff]
    %v171 = vld [vmem:[#allocation7 + $0x8] sm:$0xff]
    %v172 = vld [vmem:[#allocation7 + $0x10] sm:$0xff]
    %v173 = vld [vmem:[#allocation7 + $0x18] sm:$0xff]
    %v174 = vld [vmem:[#allocation7 + $0x20] sm:$0xff]
    %v175 = vld [vmem:[#allocation7 + $0x28] sm:$0xff]
    %v176 = vld [vmem:[#allocation7 + $0x30] sm:$0xff]
    %v177 = vld [vmem:[#allocation7 + $0x38] sm:$0xff]
    %v178 = vld [vmem:[#allocation7 + $0x40] sm:$0xff]
    %v179 = vld [vmem:[#allocation7 + $0x48] sm:$0xff]
    %v180 = vld [vmem:[#allocation7 + $0x50] sm:$0xff]
    %v181 = vld [vmem:[#allocation7 + $0x58] sm:$0xff]
    %v182 = vld [vmem:[#allocation7 + $0x60] sm:$0xff]
    %v183 = vld [vmem:[#allocation7 + $0x68] sm:$0xff]
    %v184 = vld [vmem:[#allocation7 + $0x70] sm:$0xff]
    %v185 = vld [vmem:[#allocation7 + $0x78] sm:$0xff]
    %v186 = vld [vmem:[%s3] sm:$0x1]
    %v188 = vperm.slane %v186, 0
    %190 = vmatpush.msra.mxu0 %v185
    %191 = vmatpush.msra.mxu0 %v184
    %192 = vmatpush.msra.mxu0 %v183
    %193 = vmatpush.msra.mxu0 %v182
    %194 = vmatpush.msra.mxu0 %v181
    %195 = vmatpush.msra.mxu0 %v180
    %196 = vmatpush.msra.mxu0 %v179
    %197 = vmatpush.msra.mxu0 %v178
    %198 = vmatpush.msra.mxu0 %v177
    %199 = vmatpush.msra.mxu0 %v176
    %200 = vmatpush.msra.mxu0 %v175
    %201 = vmatpush.msra.mxu0 %v174
    %202 = vmatpush.msra.mxu0 %v173
    %203 = vmatpush.msra.mxu0 %v172
    %204 = vmatpush.msra.mxu0 %v171
    %205 = vmatpush.msra.mxu0 %v170
    %206 = vmatmul.f32.gmra.mxu0 %v106
    %v207 = vpop.f32.mrf.mxu0
    %v208 = vadd.f32 %v188, %v207
    %209 = vmatmul.f32.gmra.mxu0 %v107
    %v210 = vpop.f32.mrf.mxu0
    %v211 = vadd.f32 %v188, %v210
    %212 = vmatmul.f32.gmra.mxu0 %v108
    %v213 = vpop.f32.mrf.mxu0
    %v214 = vadd.f32 %v188, %v213
    %215 = vmatmul.f32.gmra.mxu0 %v109
    %v216 = vpop.f32.mrf.mxu0
    %v217 = vadd.f32 %v188, %v216
    %218 = vmatmul.f32.gmra.mxu0 %v110
    %v219 = vpop.f32.mrf.mxu0
    %v220 = vadd.f32 %v188, %v219
    %221 = vmatmul.f32.gmra.mxu0 %v111
    %v222 = vpop.f32.mrf.mxu0
    %v223 = vadd.f32 %v188, %v222
    %224 = vmatmul.f32.gmra.mxu0 %v112
    %v225 = vpop.f32.mrf.mxu0
    %v226 = vadd.f32 %v188, %v225
    %227 = vmatmul.f32.gmra.mxu0 %v113
    %v228 = vpop.f32.mrf.mxu0
    %v229 = vadd.f32 %v188, %v228
    %230 = vmatmul.f32.gmra.mxu0 %v114
    %v231 = vpop.f32.mrf.mxu0
    %v232 = vadd.f32 %v188, %v231
    %233 = vmatmul.f32.gmra.mxu0 %v115
    %v234 = vpop.f32.mrf.mxu0
    %v235 = vadd.f32 %v188, %v234
    %236 = vmatmul.f32.gmra.mxu0 %v116
    %v237 = vpop.f32.mrf.mxu0
    %v238 = vadd.f32 %v188, %v237
    %239 = vmatmul.f32.gmra.mxu0 %v117
    %v240 = vpop.f32.mrf.mxu0
    %v241 = vadd.f32 %v188, %v240
    %242 = vmatmul.f32.gmra.mxu0 %v118
    %v243 = vpop.f32.mrf.mxu0
    %v244 = vadd.f32 %v188, %v243
    %245 = vmatmul.f32.gmra.mxu0 %v119
    %v246 = vpop.f32.mrf.mxu0
    %v247 = vadd.f32 %v188, %v246
    %248 = vmatmul.f32.gmra.mxu0 %v120
    %v249 = vpop.f32.mrf.mxu0
    %v250 = vadd.f32 %v188, %v249
    %251 = vmatmul.f32.gmra.mxu0 %v121
    %v252 = vpop.f32.mrf.mxu0
    %v253 = vadd.f32 %v188, %v252
    %254 = vmatmul.f32.gmra.mxu0 %v122
    %v255 = vpop.f32.mrf.mxu0
    %v256 = vadd.f32 %v188, %v255
    %257 = vmatmul.f32.gmra.mxu0 %v123
    %v258 = vpop.f32.mrf.mxu0
    %v259 = vadd.f32 %v188, %v258
    %260 = vmatmul.f32.gmra.mxu0 %v124
    %v261 = vpop.f32.mrf.mxu0
    %v262 = vadd.f32 %v188, %v261
    %263 = vmatmul.f32.gmra.mxu0 %v125
    %v264 = vpop.f32.mrf.mxu0
    %v265 = vadd.f32 %v188, %v264
    %266 = vmatmul.f32.gmra.mxu0 %v126
    %v267 = vpop.f32.mrf.mxu0
    %v268 = vadd.f32 %v188, %v267
    %269 = vmatmul.f32.gmra.mxu0 %v127
    %v270 = vpop.f32.mrf.mxu0
    %v271 = vadd.f32 %v188, %v270
    %272 = vmatmul.f32.gmra.mxu0 %v128
    %v273 = vpop.f32.mrf.mxu0
    %v274 = vadd.f32 %v188, %v273
    %275 = vmatmul.f32.gmra.mxu0 %v129
    %v276 = vpop.f32.mrf.mxu0
    %v277 = vadd.f32 %v188, %v276
    %278 = vmatmul.f32.gmra.mxu0 %v130
    %v279 = vpop.f32.mrf.mxu0
    %v280 = vadd.f32 %v188, %v279
    %281 = vmatmul.f32.gmra.mxu0 %v131
    %v282 = vpop.f32.mrf.mxu0
    %v283 = vadd.f32 %v188, %v282
    %284 = vmatmul.f32.gmra.mxu0 %v132
    %v285 = vpop.f32.mrf.mxu0
    %v286 = vadd.f32 %v188, %v285
    %287 = vmatmul.f32.gmra.mxu0 %v133
    %v288 = vpop.f32.mrf.mxu0
    %v289 = vadd.f32 %v188, %v288
    %290 = vmatmul.f32.gmra.mxu0 %v134
    %v291 = vpop.f32.mrf.mxu0
    %v292 = vadd.f32 %v188, %v291
    %293 = vmatmul.f32.gmra.mxu0 %v135
    %v294 = vpop.f32.mrf.mxu0
    %v295 = vadd.f32 %v188, %v294
    %296 = vmatmul.f32.gmra.mxu0 %v136
    %v297 = vpop.f32.mrf.mxu0
    %v298 = vadd.f32 %v188, %v297
    %299 = vmatmul.f32.gmra.mxu0 %v137
    %v300 = vpop.f32.mrf.mxu0
    %v301 = vadd.f32 %v188, %v300
    %302 = vmatmul.f32.gmra.mxu0 %v138
    %v303 = vpop.f32.mrf.mxu0
    %v304 = vadd.f32 %v188, %v303
    %305 = vmatmul.f32.gmra.mxu0 %v139
    %v306 = vpop.f32.mrf.mxu0
    %v307 = vadd.f32 %v188, %v306
    %308 = vmatmul.f32.gmra.mxu0 %v140
    %v309 = vpop.f32.mrf.mxu0
    %v310 = vadd.f32 %v188, %v309
    %311 = vmatmul.f32.gmra.mxu0 %v141
    %v312 = vpop.f32.mrf.mxu0
    %v313 = vadd.f32 %v188, %v312
    %314 = vmatmul.f32.gmra.mxu0 %v142
    %v315 = vpop.f32.mrf.mxu0
    %v316 = vadd.f32 %v188, %v315
    %317 = vmatmul.f32.gmra.mxu0 %v143
    %v318 = vpop.f32.mrf.mxu0
    %v319 = vadd.f32 %v188, %v318
    %320 = vmatmul.f32.gmra.mxu0 %v144
    %v321 = vpop.f32.mrf.mxu0
    %v322 = vadd.f32 %v188, %v321
    %323 = vmatmul.f32.gmra.mxu0 %v145
    %v324 = vpop.f32.mrf.mxu0
    %v325 = vadd.f32 %v188, %v324
    %326 = vmatmul.f32.gmra.mxu0 %v146
    %v327 = vpop.f32.mrf.mxu0
    %v328 = vadd.f32 %v188, %v327
    %329 = vmatmul.f32.gmra.mxu0 %v147
    %v330 = vpop.f32.mrf.mxu0
    %v331 = vadd.f32 %v188, %v330
    %332 = vmatmul.f32.gmra.mxu0 %v148
    %v333 = vpop.f32.mrf.mxu0
    %v334 = vadd.f32 %v188, %v333
    %335 = vmatmul.f32.gmra.mxu0 %v149
    %v336 = vpop.f32.mrf.mxu0
    %v337 = vadd.f32 %v188, %v336
    %338 = vmatmul.f32.gmra.mxu0 %v150
    %v339 = vpop.f32.mrf.mxu0
    %v340 = vadd.f32 %v188, %v339
    %341 = vmatmul.f32.gmra.mxu0 %v151
    %v342 = vpop.f32.mrf.mxu0
    %v343 = vadd.f32 %v188, %v342
    %344 = vmatmul.f32.gmra.mxu0 %v152
    %v345 = vpop.f32.mrf.mxu0
    %v346 = vadd.f32 %v188, %v345
    %347 = vmatmul.f32.gmra.mxu0 %v153
    %v348 = vpop.f32.mrf.mxu0
    %v349 = vadd.f32 %v188, %v348
    %350 = vmatmul.f32.gmra.mxu0 %v154
    %v351 = vpop.f32.mrf.mxu0
    %v352 = vadd.f32 %v188, %v351
    %353 = vmatmul.f32.gmra.mxu0 %v155
    %v354 = vpop.f32.mrf.mxu0
    %v355 = vadd.f32 %v188, %v354
    %356 = vmatmul.f32.gmra.mxu0 %v156
    %v357 = vpop.f32.mrf.mxu0
    %v358 = vadd.f32 %v188, %v357
    %359 = vmatmul.f32.gmra.mxu0 %v157
    %v360 = vpop.f32.mrf.mxu0
    %v361 = vadd.f32 %v188, %v360
    %362 = vmatmul.f32.gmra.mxu0 %v158
    %v363 = vpop.f32.mrf.mxu0
    %v364 = vadd.f32 %v188, %v363
    %365 = vmatmul.f32.gmra.mxu0 %v159
    %v366 = vpop.f32.mrf.mxu0
    %v367 = vadd.f32 %v188, %v366
    %368 = vmatmul.f32.gmra.mxu0 %v160
    %v369 = vpop.f32.mrf.mxu0
    %v370 = vadd.f32 %v188, %v369
    %371 = vmatmul.f32.gmra.mxu0 %v161
    %v372 = vpop.f32.mrf.mxu0
    %v373 = vadd.f32 %v188, %v372
    %374 = vmatmul.f32.gmra.mxu0 %v162
    %v375 = vpop.f32.mrf.mxu0
    %v376 = vadd.f32 %v188, %v375
    %377 = vmatmul.f32.gmra.mxu0 %v163
    %v378 = vpop.f32.mrf.mxu0
    %v379 = vadd.f32 %v188, %v378
    %380 = vmatmul.f32.gmra.mxu0 %v164
    %v381 = vpop.f32.mrf.mxu0
    %v382 = vadd.f32 %v188, %v381
    %383 = vmatmul.f32.gmra.mxu0 %v165
    %v384 = vpop.f32.mrf.mxu0
    %v385 = vadd.f32 %v188, %v384
    %386 = vmatmul.f32.gmra.mxu0 %v166
    %v387 = vpop.f32.mrf.mxu0
    %v388 = vadd.f32 %v188, %v387
    %389 = vmatmul.f32.gmra.mxu0 %v167
    %v390 = vpop.f32.mrf.mxu0
    %v391 = vadd.f32 %v188, %v390
    %392 = vmatmul.f32.gmra.mxu0 %v168
    %v393 = vpop.f32.mrf.mxu0
    %v394 = vadd.f32 %v188, %v393
    %395 = vmatmul.f32.gmra.mxu0 %v169
    %v396 = vpop.f32.mrf.mxu0
    %v397 = vadd.f32 %v188, %v396
    %398 = vdwg.mxu0
    %v399 = vxor.u32 %v208, 2147483648
    %v400 = vxor.u32 %v211, 2147483648
    %v401 = vxor.u32 %v214, 2147483648
    %v402 = vxor.u32 %v217, 2147483648
    %v403 = vxor.u32 %v220, 2147483648
    %v404 = vxor.u32 %v223, 2147483648
    %v405 = vxor.u32 %v226, 2147483648
    %v406 = vxor.u32 %v229, 2147483648
    %v407 = vxor.u32 %v232, 2147483648
    %v408 = vxor.u32 %v235, 2147483648
    %v409 = vxor.u32 %v238, 2147483648
    %v410 = vxor.u32 %v241, 2147483648
    %v411 = vxor.u32 %v244, 2147483648
    %v412 = vxor.u32 %v247, 2147483648
    %v413 = vxor.u32 %v250, 2147483648
    %v414 = vxor.u32 %v253, 2147483648
    %v415 = vxor.u32 %v256, 2147483648
    %v416 = vxor.u32 %v259, 2147483648
    %v417 = vxor.u32 %v262, 2147483648
    %v418 = vxor.u32 %v265, 2147483648
    %v419 = vxor.u32 %v268, 2147483648
    %v420 = vxor.u32 %v271, 2147483648
    %v421 = vxor.u32 %v274, 2147483648
    %v422 = vxor.u32 %v277, 2147483648
    %v423 = vxor.u32 %v280, 2147483648
    %v424 = vxor.u32 %v283, 2147483648
    %v425 = vxor.u32 %v286, 2147483648
    %v426 = vxor.u32 %v289, 2147483648
    %v427 = vxor.u32 %v292, 2147483648
    %v428 = vxor.u32 %v295, 2147483648
    %v429 = vxor.u32 %v298, 2147483648
    %v430 = vxor.u32 %v301, 2147483648
    %v431 = vxor.u32 %v304, 2147483648
    %v432 = vxor.u32 %v307, 2147483648
    %v433 = vxor.u32 %v310, 2147483648
    %v434 = vxor.u32 %v313, 2147483648
    %v435 = vxor.u32 %v316, 2147483648
    %v436 = vxor.u32 %v319, 2147483648
    %v437 = vxor.u32 %v322, 2147483648
    %v438 = vxor.u32 %v325, 2147483648
    %v439 = vxor.u32 %v328, 2147483648
    %v440 = vxor.u32 %v331, 2147483648
    %v441 = vxor.u32 %v334, 2147483648
    %v442 = vxor.u32 %v337, 2147483648
    %v443 = vxor.u32 %v340, 2147483648
    %v444 = vxor.u32 %v343, 2147483648
    %v445 = vxor.u32 %v346, 2147483648
    %v446 = vxor.u32 %v349, 2147483648
    %v447 = vxor.u32 %v352, 2147483648
    %v448 = vxor.u32 %v355, 2147483648
    %v449 = vxor.u32 %v358, 2147483648
    %v450 = vxor.u32 %v361, 2147483648
    %v451 = vxor.u32 %v364, 2147483648
    %v452 = vxor.u32 %v367, 2147483648
    %v453 = vxor.u32 %v370, 2147483648
    %v454 = vxor.u32 %v373, 2147483648
    %v455 = vxor.u32 %v376, 2147483648
    %v456 = vxor.u32 %v379, 2147483648
    %v457 = vxor.u32 %v382, 2147483648
    %v458 = vxor.u32 %v385, 2147483648
    %v459 = vxor.u32 %v388, 2147483648
    %v460 = vxor.u32 %v391, 2147483648
    %v461 = vxor.u32 %v394, 2147483648
    %v462 = vxor.u32 %v397, 2147483648
    %v463 = vmul.f32 %v399, 1.442695
    %v464 = vpow.pop %v463
    %v465 = vmul.f32 %v400, 1.442695
    %v466 = vpow.pop %v465
    %v467 = vmul.f32 %v401, 1.442695
    %v468 = vpow.pop %v467
    %v469 = vmul.f32 %v402, 1.442695
    %v470 = vpow.pop %v469
    %v471 = vmul.f32 %v403, 1.442695
    %v472 = vpow.pop %v471
    %v473 = vmul.f32 %v404, 1.442695
    %v474 = vpow.pop %v473
    %v475 = vmul.f32 %v405, 1.442695
    %v476 = vpow.pop %v475
    %v477 = vmul.f32 %v406, 1.442695
    %v478 = vpow.pop %v477
    %v479 = vmul.f32 %v407, 1.442695
    %v480 = vpow.pop %v479
    %v481 = vmul.f32 %v408, 1.442695
    %v482 = vpow.pop %v481
    %v483 = vmul.f32 %v409, 1.442695
    %v484 = vpow.pop %v483
    %v485 = vmul.f32 %v410, 1.442695
    %v486 = vpow.pop %v485
    %v487 = vmul.f32 %v411, 1.442695
    %v488 = vpow.pop %v487
    %v489 = vmul.f32 %v412, 1.442695
    %v490 = vpow.pop %v489
    %v491 = vmul.f32 %v413, 1.442695
    %v492 = vpow.pop %v491
    %v493 = vmul.f32 %v414, 1.442695
    %v494 = vpow.pop %v493
    %v495 = vmul.f32 %v415, 1.442695
    %v496 = vpow.pop %v495
    %v497 = vmul.f32 %v416, 1.442695
    %v498 = vpow.pop %v497
    %v499 = vmul.f32 %v417, 1.442695
    %v500 = vpow.pop %v499
    %v501 = vmul.f32 %v418, 1.442695
    %v502 = vpow.pop %v501
    %v503 = vmul.f32 %v419, 1.442695
    %v504 = vpow.pop %v503
    %v505 = vmul.f32 %v420, 1.442695
    %v506 = vpow.pop %v505
    %v507 = vmul.f32 %v421, 1.442695
    %v508 = vpow.pop %v507
    %v509 = vmul.f32 %v422, 1.442695
    %v510 = vpow.pop %v509
    %v511 = vmul.f32 %v423, 1.442695
    %v512 = vpow.pop %v511
    %v513 = vmul.f32 %v424, 1.442695
    %v514 = vpow.pop %v513
    %v515 = vmul.f32 %v425, 1.442695
    %v516 = vpow.pop %v515
    %v517 = vmul.f32 %v426, 1.442695
    %v518 = vpow.pop %v517
    %v519 = vmul.f32 %v427, 1.442695
    %v520 = vpow.pop %v519
    %v521 = vmul.f32 %v428, 1.442695
    %v522 = vpow.pop %v521
    %v523 = vmul.f32 %v429, 1.442695
    %v524 = vpow.pop %v523
    %v525 = vmul.f32 %v430, 1.442695
    %v526 = vpow.pop %v525
    %v527 = vmul.f32 %v431, 1.442695
    %v528 = vpow.pop %v527
    %v529 = vmul.f32 %v432, 1.442695
    %v530 = vpow.pop %v529
    %v531 = vmul.f32 %v433, 1.442695
    %v532 = vpow.pop %v531
    %v533 = vmul.f32 %v434, 1.442695
    %v534 = vpow.pop %v533
    %v535 = vmul.f32 %v435, 1.442695
    %v536 = vpow.pop %v535
    %v537 = vmul.f32 %v436, 1.442695
    %v538 = vpow.pop %v537
    %v539 = vmul.f32 %v437, 1.442695
    %v540 = vpow.pop %v539
    %v541 = vmul.f32 %v438, 1.442695
    %v542 = vpow.pop %v541
    %v543 = vmul.f32 %v439, 1.442695
    %v544 = vpow.pop %v543
    %v545 = vmul.f32 %v440, 1.442695
    %v546 = vpow.pop %v545
    %v547 = vmul.f32 %v441, 1.442695
    %v548 = vpow.pop %v547
    %v549 = vmul.f32 %v442, 1.442695
    %v550 = vpow.pop %v549
    %v551 = vmul.f32 %v443, 1.442695
    %v552 = vpow.pop %v551
    %v553 = vmul.f32 %v444, 1.442695
    %v554 = vpow.pop %v553
    %v555 = vmul.f32 %v445, 1.442695
    %v556 = vpow.pop %v555
    %v557 = vmul.f32 %v446, 1.442695
    %v558 = vpow.pop %v557
    %v559 = vmul.f32 %v447, 1.442695
    %v560 = vpow.pop %v559
    %v561 = vmul.f32 %v448, 1.442695
    %v562 = vpow.pop %v561
    %v563 = vmul.f32 %v449, 1.442695
    %v564 = vpow.pop %v563
    %v565 = vmul.f32 %v450, 1.442695
    %v566 = vpow.pop %v565
    %v567 = vmul.f32 %v451, 1.442695
    %v568 = vpow.pop %v567
    %v569 = vmul.f32 %v452, 1.442695
    %v570 = vpow.pop %v569
    %v571 = vmul.f32 %v453, 1.442695
    %v572 = vpow.pop %v571
    %v573 = vmul.f32 %v454, 1.442695
    %v574 = vpow.pop %v573
    %v575 = vmul.f32 %v455, 1.442695
    %v576 = vpow.pop %v575
    %v577 = vmul.f32 %v456, 1.442695
    %v578 = vpow.pop %v577
    %v579 = vmul.f32 %v457, 1.442695
    %v580 = vpow.pop %v579
    %v581 = vmul.f32 %v458, 1.442695
    %v582 = vpow.pop %v581
    %v583 = vmul.f32 %v459, 1.442695
    %v584 = vpow.pop %v583
    %v585 = vmul.f32 %v460, 1.442695
    %v586 = vpow.pop %v585
    %v587 = vmul.f32 %v461, 1.442695
    %v588 = vpow.pop %v587
    %v589 = vmul.f32 %v462, 1.442695
    %v590 = vpow.pop %v589
    %v591 = vadd.f32 %v464, 1.0
    %v592 = vadd.f32 %v466, 1.0
    %v593 = vadd.f32 %v468, 1.0
    %v594 = vadd.f32 %v470, 1.0
    %v595 = vadd.f32 %v472, 1.0
    %v596 = vadd.f32 %v474, 1.0
    %v597 = vadd.f32 %v476, 1.0
    %v598 = vadd.f32 %v478, 1.0
    %v599 = vadd.f32 %v480, 1.0
    %v600 = vadd.f32 %v482, 1.0
    %v601 = vadd.f32 %v484, 1.0
    %v602 = vadd.f32 %v486, 1.0
    %v603 = vadd.f32 %v488, 1.0
    %v604 = vadd.f32 %v490, 1.0
    %v605 = vadd.f32 %v492, 1.0
    %v606 = vadd.f32 %v494, 1.0
    %v607 = vadd.f32 %v496, 1.0
    %v608 = vadd.f32 %v498, 1.0
    %v609 = vadd.f32 %v500, 1.0
    %v610 = vadd.f32 %v502, 1.0
    %v611 = vadd.f32 %v504, 1.0
    %v612 = vadd.f32 %v506, 1.0
    %v613 = vadd.f32 %v508, 1.0
    %v614 = vadd.f32 %v510, 1.0
    %v615 = vadd.f32 %v512, 1.0
    %v616 = vadd.f32 %v514, 1.0
    %v617 = vadd.f32 %v516, 1.0
    %v618 = vadd.f32 %v518, 1.0
    %v619 = vadd.f32 %v520, 1.0
    %v620 = vadd.f32 %v522, 1.0
    %v621 = vadd.f32 %v524, 1.0
    %v622 = vadd.f32 %v526, 1.0
    %v623 = vadd.f32 %v528, 1.0
    %v624 = vadd.f32 %v530, 1.0
    %v625 = vadd.f32 %v532, 1.0
    %v626 = vadd.f32 %v534, 1.0
    %v627 = vadd.f32 %v536, 1.0
    %v628 = vadd.f32 %v538, 1.0
    %v629 = vadd.f32 %v540, 1.0
    %v630 = vadd.f32 %v542, 1.0
    %v631 = vadd.f32 %v544, 1.0
    %v632 = vadd.f32 %v546, 1.0
    %v633 = vadd.f32 %v548, 1.0
    %v634 = vadd.f32 %v550, 1.0
    %v635 = vadd.f32 %v552, 1.0
    %v636 = vadd.f32 %v554, 1.0
    %v637 = vadd.f32 %v556, 1.0
    %v638 = vadd.f32 %v558, 1.0
    %v639 = vadd.f32 %v560, 1.0
    %v640 = vadd.f32 %v562, 1.0
    %v641 = vadd.f32 %v564, 1.0
    %v642 = vadd.f32 %v566, 1.0
    %v643 = vadd.f32 %v568, 1.0
    %v644 = vadd.f32 %v570, 1.0
    %v645 = vadd.f32 %v572, 1.0
    %v646 = vadd.f32 %v574, 1.0
    %v647 = vadd.f32 %v576, 1.0
    %v648 = vadd.f32 %v578, 1.0
    %v649 = vadd.f32 %v580, 1.0
    %v650 = vadd.f32 %v582, 1.0
    %v651 = vadd.f32 %v584, 1.0
    %v652 = vadd.f32 %v586, 1.0
    %v653 = vadd.f32 %v588, 1.0
    %v654 = vadd.f32 %v590, 1.0
    %v655 = vrcp.pop %v591
    %v656 = vmul.f32 %v591, %v655
    %v657 = vsub.f32 1.0, %v656
    %v658 = vmul.f32 %v655, %v657
    %v659 = vadd.f32 %v655, %v658
    %vm660 = vweird.f32 %v591
    %vm661 = vweird.f32 %v655
    %vm662 = vmor %vm660, %vm661
    %v663 = vsel %vm662, %v655, %v659
    %v664 = vand.u32 2147483647, %v591
    %vm665 = vcmp.eq.f32.partialorder %v664, 8.507059e+37
    %v666 = vand.u32 %v591, 2147483648
    %v667 = vor.u32 1.1754944e-38, %v666
    %v668 = vsel %vm665, %v667, %v663
    %v669 = vmul.f32 1.0, %v668
    %v670 = vrcp.pop %v592
    %v671 = vmul.f32 %v592, %v670
    %v672 = vsub.f32 1.0, %v671
    %v673 = vmul.f32 %v670, %v672
    %v674 = vadd.f32 %v670, %v673
    %vm675 = vweird.f32 %v592
    %vm676 = vweird.f32 %v670
    %vm677 = vmor %vm675, %vm676
    %v678 = vsel %vm677, %v670, %v674
    %v679 = vand.u32 2147483647, %v592
    %vm680 = vcmp.eq.f32.partialorder %v679, 8.507059e+37
    %v681 = vand.u32 %v592, 2147483648
    %v682 = vor.u32 1.1754944e-38, %v681
    %v683 = vsel %vm680, %v682, %v678
    %v684 = vmul.f32 1.0, %v683
    %v685 = vrcp.pop %v593
    %v686 = vmul.f32 %v593, %v685
    %v687 = vsub.f32 1.0, %v686
    %v688 = vmul.f32 %v685, %v687
    %v689 = vadd.f32 %v685, %v688
    %vm690 = vweird.f32 %v593
    %vm691 = vweird.f32 %v685
    %vm692 = vmor %vm690, %vm691
    %v693 = vsel %vm692, %v685, %v689
    %v694 = vand.u32 2147483647, %v593
    %vm695 = vcmp.eq.f32.partialorder %v694, 8.507059e+37
    %v696 = vand.u32 %v593, 2147483648
    %v697 = vor.u32 1.1754944e-38, %v696
    %v698 = vsel %vm695, %v697, %v693
    %v699 = vmul.f32 1.0, %v698
    %v700 = vrcp.pop %v594
    %v701 = vmul.f32 %v594, %v700
    %v702 = vsub.f32 1.0, %v701
    %v703 = vmul.f32 %v700, %v702
    %v704 = vadd.f32 %v700, %v703
    %vm705 = vweird.f32 %v594
    %vm706 = vweird.f32 %v700
    %vm707 = vmor %vm705, %vm706
    %v708 = vsel %vm707, %v700, %v704
    %v709 = vand.u32 2147483647, %v594
    %vm710 = vcmp.eq.f32.partialorder %v709, 8.507059e+37
    %v711 = vand.u32 %v594, 2147483648
    %v712 = vor.u32 1.1754944e-38, %v711
    %v713 = vsel %vm710, %v712, %v708
    %v714 = vmul.f32 1.0, %v713
    %v715 = vrcp.pop %v595
    %v716 = vmul.f32 %v595, %v715
    %v717 = vsub.f32 1.0, %v716
    %v718 = vmul.f32 %v715, %v717
    %v719 = vadd.f32 %v715, %v718
    %vm720 = vweird.f32 %v595
    %vm721 = vweird.f32 %v715
    %vm722 = vmor %vm720, %vm721
    %v723 = vsel %vm722, %v715, %v719
    %v724 = vand.u32 2147483647, %v595
    %vm725 = vcmp.eq.f32.partialorder %v724, 8.507059e+37
    %v726 = vand.u32 %v595, 2147483648
    %v727 = vor.u32 1.1754944e-38, %v726
    %v728 = vsel %vm725, %v727, %v723
    %v729 = vmul.f32 1.0, %v728
    %v730 = vrcp.pop %v596
    %v731 = vmul.f32 %v596, %v730
    %v732 = vsub.f32 1.0, %v731
    %v733 = vmul.f32 %v730, %v732
    %v734 = vadd.f32 %v730, %v733
    %vm735 = vweird.f32 %v596
    %vm736 = vweird.f32 %v730
    %vm737 = vmor %vm735, %vm736
    %v738 = vsel %vm737, %v730, %v734
    %v739 = vand.u32 2147483647, %v596
    %vm740 = vcmp.eq.f32.partialorder %v739, 8.507059e+37
    %v741 = vand.u32 %v596, 2147483648
    %v742 = vor.u32 1.1754944e-38, %v741
    %v743 = vsel %vm740, %v742, %v738
    %v744 = vmul.f32 1.0, %v743
    %v745 = vrcp.pop %v597
    %v746 = vmul.f32 %v597, %v745
    %v747 = vsub.f32 1.0, %v746
    %v748 = vmul.f32 %v745, %v747
    %v749 = vadd.f32 %v745, %v748
    %vm750 = vweird.f32 %v597
    %vm751 = vweird.f32 %v745
    %vm752 = vmor %vm750, %vm751
    %v753 = vsel %vm752, %v745, %v749
    %v754 = vand.u32 2147483647, %v597
    %vm755 = vcmp.eq.f32.partialorder %v754, 8.507059e+37
    %v756 = vand.u32 %v597, 2147483648
    %v757 = vor.u32 1.1754944e-38, %v756
    %v758 = vsel %vm755, %v757, %v753
    %v759 = vmul.f32 1.0, %v758
    %v760 = vrcp.pop %v598
    %v761 = vmul.f32 %v598, %v760
    %v762 = vsub.f32 1.0, %v761
    %v763 = vmul.f32 %v760, %v762
    %v764 = vadd.f32 %v760, %v763
    %vm765 = vweird.f32 %v598
    %vm766 = vweird.f32 %v760
    %vm767 = vmor %vm765, %vm766
    %v768 = vsel %vm767, %v760, %v764
    %v769 = vand.u32 2147483647, %v598
    %vm770 = vcmp.eq.f32.partialorder %v769, 8.507059e+37
    %v771 = vand.u32 %v598, 2147483648
    %v772 = vor.u32 1.1754944e-38, %v771
    %v773 = vsel %vm770, %v772, %v768
    %v774 = vmul.f32 1.0, %v773
    %v775 = vrcp.pop %v599
    %v776 = vmul.f32 %v599, %v775
    %v777 = vsub.f32 1.0, %v776
    %v778 = vmul.f32 %v775, %v777
    %v779 = vadd.f32 %v775, %v778
    %vm780 = vweird.f32 %v599
    %vm781 = vweird.f32 %v775
    %vm782 = vmor %vm780, %vm781
    %v783 = vsel %vm782, %v775, %v779
    %v784 = vand.u32 2147483647, %v599
    %vm785 = vcmp.eq.f32.partialorder %v784, 8.507059e+37
    %v786 = vand.u32 %v599, 2147483648
    %v787 = vor.u32 1.1754944e-38, %v786
    %v788 = vsel %vm785, %v787, %v783
    %v789 = vmul.f32 1.0, %v788
    %v790 = vrcp.pop %v600
    %v791 = vmul.f32 %v600, %v790
    %v792 = vsub.f32 1.0, %v791
    %v793 = vmul.f32 %v790, %v792
    %v794 = vadd.f32 %v790, %v793
    %vm795 = vweird.f32 %v600
    %vm796 = vweird.f32 %v790
    %vm797 = vmor %vm795, %vm796
    %v798 = vsel %vm797, %v790, %v794
    %v799 = vand.u32 2147483647, %v600
    %vm800 = vcmp.eq.f32.partialorder %v799, 8.507059e+37
    %v801 = vand.u32 %v600, 2147483648
    %v802 = vor.u32 1.1754944e-38, %v801
    %v803 = vsel %vm800, %v802, %v798
    %v804 = vmul.f32 1.0, %v803
    %v805 = vrcp.pop %v601
    %v806 = vmul.f32 %v601, %v805
    %v807 = vsub.f32 1.0, %v806
    %v808 = vmul.f32 %v805, %v807
    %v809 = vadd.f32 %v805, %v808
    %vm810 = vweird.f32 %v601
    %vm811 = vweird.f32 %v805
    %vm812 = vmor %vm810, %vm811
    %v813 = vsel %vm812, %v805, %v809
    %v814 = vand.u32 2147483647, %v601
    %vm815 = vcmp.eq.f32.partialorder %v814, 8.507059e+37
    %v816 = vand.u32 %v601, 2147483648
    %v817 = vor.u32 1.1754944e-38, %v816
    %v818 = vsel %vm815, %v817, %v813
    %v819 = vmul.f32 1.0, %v818
    %v820 = vrcp.pop %v602
    %v821 = vmul.f32 %v602, %v820
    %v822 = vsub.f32 1.0, %v821
    %v823 = vmul.f32 %v820, %v822
    %v824 = vadd.f32 %v820, %v823
    %vm825 = vweird.f32 %v602
    %vm826 = vweird.f32 %v820
    %vm827 = vmor %vm825, %vm826
    %v828 = vsel %vm827, %v820, %v824
    %v829 = vand.u32 2147483647, %v602
    %vm830 = vcmp.eq.f32.partialorder %v829, 8.507059e+37
    %v831 = vand.u32 %v602, 2147483648
    %v832 = vor.u32 1.1754944e-38, %v831
    %v833 = vsel %vm830, %v832, %v828
    %v834 = vmul.f32 1.0, %v833
    %v835 = vrcp.pop %v603
    %v836 = vmul.f32 %v603, %v835
    %v837 = vsub.f32 1.0, %v836
    %v838 = vmul.f32 %v835, %v837
    %v839 = vadd.f32 %v835, %v838
    %vm840 = vweird.f32 %v603
    %vm841 = vweird.f32 %v835
    %vm842 = vmor %vm840, %vm841
    %v843 = vsel %vm842, %v835, %v839
    %v844 = vand.u32 2147483647, %v603
    %vm845 = vcmp.eq.f32.partialorder %v844, 8.507059e+37
    %v846 = vand.u32 %v603, 2147483648
    %v847 = vor.u32 1.1754944e-38, %v846
    %v848 = vsel %vm845, %v847, %v843
    %v849 = vmul.f32 1.0, %v848
    %v850 = vrcp.pop %v604
    %v851 = vmul.f32 %v604, %v850
    %v852 = vsub.f32 1.0, %v851
    %v853 = vmul.f32 %v850, %v852
    %v854 = vadd.f32 %v850, %v853
    %vm855 = vweird.f32 %v604
    %vm856 = vweird.f32 %v850
    %vm857 = vmor %vm855, %vm856
    %v858 = vsel %vm857, %v850, %v854
    %v859 = vand.u32 2147483647, %v604
    %vm860 = vcmp.eq.f32.partialorder %v859, 8.507059e+37
    %v861 = vand.u32 %v604, 2147483648
    %v862 = vor.u32 1.1754944e-38, %v861
    %v863 = vsel %vm860, %v862, %v858
    %v864 = vmul.f32 1.0, %v863
    %v865 = vrcp.pop %v605
    %v866 = vmul.f32 %v605, %v865
    %v867 = vsub.f32 1.0, %v866
    %v868 = vmul.f32 %v865, %v867
    %v869 = vadd.f32 %v865, %v868
    %vm870 = vweird.f32 %v605
    %vm871 = vweird.f32 %v865
    %vm872 = vmor %vm870, %vm871
    %v873 = vsel %vm872, %v865, %v869
    %v874 = vand.u32 2147483647, %v605
    %vm875 = vcmp.eq.f32.partialorder %v874, 8.507059e+37
    %v876 = vand.u32 %v605, 2147483648
    %v877 = vor.u32 1.1754944e-38, %v876
    %v878 = vsel %vm875, %v877, %v873
    %v879 = vmul.f32 1.0, %v878
    %v880 = vrcp.pop %v606
    %v881 = vmul.f32 %v606, %v880
    %v882 = vsub.f32 1.0, %v881
    %v883 = vmul.f32 %v880, %v882
    %v884 = vadd.f32 %v880, %v883
    %vm885 = vweird.f32 %v606
    %vm886 = vweird.f32 %v880
    %vm887 = vmor %vm885, %vm886
    %v888 = vsel %vm887, %v880, %v884
    %v889 = vand.u32 2147483647, %v606
    %vm890 = vcmp.eq.f32.partialorder %v889, 8.507059e+37
    %v891 = vand.u32 %v606, 2147483648
    %v892 = vor.u32 1.1754944e-38, %v891
    %v893 = vsel %vm890, %v892, %v888
    %v894 = vmul.f32 1.0, %v893
    %v895 = vrcp.pop %v607
    %v896 = vmul.f32 %v607, %v895
    %v897 = vsub.f32 1.0, %v896
    %v898 = vmul.f32 %v895, %v897
    %v899 = vadd.f32 %v895, %v898
    %vm900 = vweird.f32 %v607
    %vm901 = vweird.f32 %v895
    %vm902 = vmor %vm900, %vm901
    %v903 = vsel %vm902, %v895, %v899
    %v904 = vand.u32 2147483647, %v607
    %vm905 = vcmp.eq.f32.partialorder %v904, 8.507059e+37
    %v906 = vand.u32 %v607, 2147483648
    %v907 = vor.u32 1.1754944e-38, %v906
    %v908 = vsel %vm905, %v907, %v903
    %v909 = vmul.f32 1.0, %v908
    %v910 = vrcp.pop %v608
    %v911 = vmul.f32 %v608, %v910
    %v912 = vsub.f32 1.0, %v911
    %v913 = vmul.f32 %v910, %v912
    %v914 = vadd.f32 %v910, %v913
    %vm915 = vweird.f32 %v608
    %vm916 = vweird.f32 %v910
    %vm917 = vmor %vm915, %vm916
    %v918 = vsel %vm917, %v910, %v914
    %v919 = vand.u32 2147483647, %v608
    %vm920 = vcmp.eq.f32.partialorder %v919, 8.507059e+37
    %v921 = vand.u32 %v608, 2147483648
    %v922 = vor.u32 1.1754944e-38, %v921
    %v923 = vsel %vm920, %v922, %v918
    %v924 = vmul.f32 1.0, %v923
    %v925 = vrcp.pop %v609
    %v926 = vmul.f32 %v609, %v925
    %v927 = vsub.f32 1.0, %v926
    %v928 = vmul.f32 %v925, %v927
    %v929 = vadd.f32 %v925, %v928
    %vm930 = vweird.f32 %v609
    %vm931 = vweird.f32 %v925
    %vm932 = vmor %vm930, %vm931
    %v933 = vsel %vm932, %v925, %v929
    %v934 = vand.u32 2147483647, %v609
    %vm935 = vcmp.eq.f32.partialorder %v934, 8.507059e+37
    %v936 = vand.u32 %v609, 2147483648
    %v937 = vor.u32 1.1754944e-38, %v936
    %v938 = vsel %vm935, %v937, %v933
    %v939 = vmul.f32 1.0, %v938
    %v940 = vrcp.pop %v610
    %v941 = vmul.f32 %v610, %v940
    %v942 = vsub.f32 1.0, %v941
    %v943 = vmul.f32 %v940, %v942
    %v944 = vadd.f32 %v940, %v943
    %vm945 = vweird.f32 %v610
    %vm946 = vweird.f32 %v940
    %vm947 = vmor %vm945, %vm946
    %v948 = vsel %vm947, %v940, %v944
    %v949 = vand.u32 2147483647, %v610
    %vm950 = vcmp.eq.f32.partialorder %v949, 8.507059e+37
    %v951 = vand.u32 %v610, 2147483648
    %v952 = vor.u32 1.1754944e-38, %v951
    %v953 = vsel %vm950, %v952, %v948
    %v954 = vmul.f32 1.0, %v953
    %v955 = vrcp.pop %v611
    %v956 = vmul.f32 %v611, %v955
    %v957 = vsub.f32 1.0, %v956
    %v958 = vmul.f32 %v955, %v957
    %v959 = vadd.f32 %v955, %v958
    %vm960 = vweird.f32 %v611
    %vm961 = vweird.f32 %v955
    %vm962 = vmor %vm960, %vm961
    %v963 = vsel %vm962, %v955, %v959
    %v964 = vand.u32 2147483647, %v611
    %vm965 = vcmp.eq.f32.partialorder %v964, 8.507059e+37
    %v966 = vand.u32 %v611, 2147483648
    %v967 = vor.u32 1.1754944e-38, %v966
    %v968 = vsel %vm965, %v967, %v963
    %v969 = vmul.f32 1.0, %v968
    %v970 = vrcp.pop %v612
    %v971 = vmul.f32 %v612, %v970
    %v972 = vsub.f32 1.0, %v971
    %v973 = vmul.f32 %v970, %v972
    %v974 = vadd.f32 %v970, %v973
    %vm975 = vweird.f32 %v612
    %vm976 = vweird.f32 %v970
    %vm977 = vmor %vm975, %vm976
    %v978 = vsel %vm977, %v970, %v974
    %v979 = vand.u32 2147483647, %v612
    %vm980 = vcmp.eq.f32.partialorder %v979, 8.507059e+37
    %v981 = vand.u32 %v612, 2147483648
    %v982 = vor.u32 1.1754944e-38, %v981
    %v983 = vsel %vm980, %v982, %v978
    %v984 = vmul.f32 1.0, %v983
    %v985 = vrcp.pop %v613
    %v986 = vmul.f32 %v613, %v985
    %v987 = vsub.f32 1.0, %v986
    %v988 = vmul.f32 %v985, %v987
    %v989 = vadd.f32 %v985, %v988
    %vm990 = vweird.f32 %v613
    %vm991 = vweird.f32 %v985
    %vm992 = vmor %vm990, %vm991
    %v993 = vsel %vm992, %v985, %v989
    %v994 = vand.u32 2147483647, %v613
    %vm995 = vcmp.eq.f32.partialorder %v994, 8.507059e+37
    %v996 = vand.u32 %v613, 2147483648
    %v997 = vor.u32 1.1754944e-38, %v996
    %v998 = vsel %vm995, %v997, %v993
    %v999 = vmul.f32 1.0, %v998
    %v1000 = vrcp.pop %v614
    %v1001 = vmul.f32 %v614, %v1000
    %v1002 = vsub.f32 1.0, %v1001
    %v1003 = vmul.f32 %v1000, %v1002
    %v1004 = vadd.f32 %v1000, %v1003
    %vm1005 = vweird.f32 %v614
    %vm1006 = vweird.f32 %v1000
    %vm1007 = vmor %vm1005, %vm1006
    %v1008 = vsel %vm1007, %v1000, %v1004
    %v1009 = vand.u32 2147483647, %v614
    %vm1010 = vcmp.eq.f32.partialorder %v1009, 8.507059e+37
    %v1011 = vand.u32 %v614, 2147483648
    %v1012 = vor.u32 1.1754944e-38, %v1011
    %v1013 = vsel %vm1010, %v1012, %v1008
    %v1014 = vmul.f32 1.0, %v1013
    %v1015 = vrcp.pop %v615
    %v1016 = vmul.f32 %v615, %v1015
    %v1017 = vsub.f32 1.0, %v1016
    %v1018 = vmul.f32 %v1015, %v1017
    %v1019 = vadd.f32 %v1015, %v1018
    %vm1020 = vweird.f32 %v615
    %vm1021 = vweird.f32 %v1015
    %vm1022 = vmor %vm1020, %vm1021
    %v1023 = vsel %vm1022, %v1015, %v1019
    %v1024 = vand.u32 2147483647, %v615
    %vm1025 = vcmp.eq.f32.partialorder %v1024, 8.507059e+37
    %v1026 = vand.u32 %v615, 2147483648
    %v1027 = vor.u32 1.1754944e-38, %v1026
    %v1028 = vsel %vm1025, %v1027, %v1023
    %v1029 = vmul.f32 1.0, %v1028
    %v1030 = vrcp.pop %v616
    %v1031 = vmul.f32 %v616, %v1030
    %v1032 = vsub.f32 1.0, %v1031
    %v1033 = vmul.f32 %v1030, %v1032
    %v1034 = vadd.f32 %v1030, %v1033
    %vm1035 = vweird.f32 %v616
    %vm1036 = vweird.f32 %v1030
    %vm1037 = vmor %vm1035, %vm1036
    %v1038 = vsel %vm1037, %v1030, %v1034
    %v1039 = vand.u32 2147483647, %v616
    %vm1040 = vcmp.eq.f32.partialorder %v1039, 8.507059e+37
    %v1041 = vand.u32 %v616, 2147483648
    %v1042 = vor.u32 1.1754944e-38, %v1041
    %v1043 = vsel %vm1040, %v1042, %v1038
    %v1044 = vmul.f32 1.0, %v1043
    %v1045 = vrcp.pop %v617
    %v1046 = vmul.f32 %v617, %v1045
    %v1047 = vsub.f32 1.0, %v1046
    %v1048 = vmul.f32 %v1045, %v1047
    %v1049 = vadd.f32 %v1045, %v1048
    %vm1050 = vweird.f32 %v617
    %vm1051 = vweird.f32 %v1045
    %vm1052 = vmor %vm1050, %vm1051
    %v1053 = vsel %vm1052, %v1045, %v1049
    %v1054 = vand.u32 2147483647, %v617
    %vm1055 = vcmp.eq.f32.partialorder %v1054, 8.507059e+37
    %v1056 = vand.u32 %v617, 2147483648
    %v1057 = vor.u32 1.1754944e-38, %v1056
    %v1058 = vsel %vm1055, %v1057, %v1053
    %v1059 = vmul.f32 1.0, %v1058
    %v1060 = vrcp.pop %v618
    %v1061 = vmul.f32 %v618, %v1060
    %v1062 = vsub.f32 1.0, %v1061
    %v1063 = vmul.f32 %v1060, %v1062
    %v1064 = vadd.f32 %v1060, %v1063
    %vm1065 = vweird.f32 %v618
    %vm1066 = vweird.f32 %v1060
    %vm1067 = vmor %vm1065, %vm1066
    %v1068 = vsel %vm1067, %v1060, %v1064
    %v1069 = vand.u32 2147483647, %v618
    %vm1070 = vcmp.eq.f32.partialorder %v1069, 8.507059e+37
    %v1071 = vand.u32 %v618, 2147483648
    %v1072 = vor.u32 1.1754944e-38, %v1071
    %v1073 = vsel %vm1070, %v1072, %v1068
    %v1074 = vmul.f32 1.0, %v1073
    %v1075 = vrcp.pop %v619
    %v1076 = vmul.f32 %v619, %v1075
    %v1077 = vsub.f32 1.0, %v1076
    %v1078 = vmul.f32 %v1075, %v1077
    %v1079 = vadd.f32 %v1075, %v1078
    %vm1080 = vweird.f32 %v619
    %vm1081 = vweird.f32 %v1075
    %vm1082 = vmor %vm1080, %vm1081
    %v1083 = vsel %vm1082, %v1075, %v1079
    %v1084 = vand.u32 2147483647, %v619
    %vm1085 = vcmp.eq.f32.partialorder %v1084, 8.507059e+37
    %v1086 = vand.u32 %v619, 2147483648
    %v1087 = vor.u32 1.1754944e-38, %v1086
    %v1088 = vsel %vm1085, %v1087, %v1083
    %v1089 = vmul.f32 1.0, %v1088
    %v1090 = vrcp.pop %v620
    %v1091 = vmul.f32 %v620, %v1090
    %v1092 = vsub.f32 1.0, %v1091
    %v1093 = vmul.f32 %v1090, %v1092
    %v1094 = vadd.f32 %v1090, %v1093
    %vm1095 = vweird.f32 %v620
    %vm1096 = vweird.f32 %v1090
    %vm1097 = vmor %vm1095, %vm1096
    %v1098 = vsel %vm1097, %v1090, %v1094
    %v1099 = vand.u32 2147483647, %v620
    %vm1100 = vcmp.eq.f32.partialorder %v1099, 8.507059e+37
    %v1101 = vand.u32 %v620, 2147483648
    %v1102 = vor.u32 1.1754944e-38, %v1101
    %v1103 = vsel %vm1100, %v1102, %v1098
    %v1104 = vmul.f32 1.0, %v1103
    %v1105 = vrcp.pop %v621
    %v1106 = vmul.f32 %v621, %v1105
    %v1107 = vsub.f32 1.0, %v1106
    %v1108 = vmul.f32 %v1105, %v1107
    %v1109 = vadd.f32 %v1105, %v1108
    %vm1110 = vweird.f32 %v621
    %vm1111 = vweird.f32 %v1105
    %vm1112 = vmor %vm1110, %vm1111
    %v1113 = vsel %vm1112, %v1105, %v1109
    %v1114 = vand.u32 2147483647, %v621
    %vm1115 = vcmp.eq.f32.partialorder %v1114, 8.507059e+37
    %v1116 = vand.u32 %v621, 2147483648
    %v1117 = vor.u32 1.1754944e-38, %v1116
    %v1118 = vsel %vm1115, %v1117, %v1113
    %v1119 = vmul.f32 1.0, %v1118
    %v1120 = vrcp.pop %v622
    %v1121 = vmul.f32 %v622, %v1120
    %v1122 = vsub.f32 1.0, %v1121
    %v1123 = vmul.f32 %v1120, %v1122
    %v1124 = vadd.f32 %v1120, %v1123
    %vm1125 = vweird.f32 %v622
    %vm1126 = vweird.f32 %v1120
    %vm1127 = vmor %vm1125, %vm1126
    %v1128 = vsel %vm1127, %v1120, %v1124
    %v1129 = vand.u32 2147483647, %v622
    %vm1130 = vcmp.eq.f32.partialorder %v1129, 8.507059e+37
    %v1131 = vand.u32 %v622, 2147483648
    %v1132 = vor.u32 1.1754944e-38, %v1131
    %v1133 = vsel %vm1130, %v1132, %v1128
    %v1134 = vmul.f32 1.0, %v1133
    %v1135 = vrcp.pop %v623
    %v1136 = vmul.f32 %v623, %v1135
    %v1137 = vsub.f32 1.0, %v1136
    %v1138 = vmul.f32 %v1135, %v1137
    %v1139 = vadd.f32 %v1135, %v1138
    %vm1140 = vweird.f32 %v623
    %vm1141 = vweird.f32 %v1135
    %vm1142 = vmor %vm1140, %vm1141
    %v1143 = vsel %vm1142, %v1135, %v1139
    %v1144 = vand.u32 2147483647, %v623
    %vm1145 = vcmp.eq.f32.partialorder %v1144, 8.507059e+37
    %v1146 = vand.u32 %v623, 2147483648
    %v1147 = vor.u32 1.1754944e-38, %v1146
    %v1148 = vsel %vm1145, %v1147, %v1143
    %v1149 = vmul.f32 1.0, %v1148
    %v1150 = vrcp.pop %v624
    %v1151 = vmul.f32 %v624, %v1150
    %v1152 = vsub.f32 1.0, %v1151
    %v1153 = vmul.f32 %v1150, %v1152
    %v1154 = vadd.f32 %v1150, %v1153
    %vm1155 = vweird.f32 %v624
    %vm1156 = vweird.f32 %v1150
    %vm1157 = vmor %vm1155, %vm1156
    %v1158 = vsel %vm1157, %v1150, %v1154
    %v1159 = vand.u32 2147483647, %v624
    %vm1160 = vcmp.eq.f32.partialorder %v1159, 8.507059e+37
    %v1161 = vand.u32 %v624, 2147483648
    %v1162 = vor.u32 1.1754944e-38, %v1161
    %v1163 = vsel %vm1160, %v1162, %v1158
    %v1164 = vmul.f32 1.0, %v1163
    %v1165 = vrcp.pop %v625
    %v1166 = vmul.f32 %v625, %v1165
    %v1167 = vsub.f32 1.0, %v1166
    %v1168 = vmul.f32 %v1165, %v1167
    %v1169 = vadd.f32 %v1165, %v1168
    %vm1170 = vweird.f32 %v625
    %vm1171 = vweird.f32 %v1165
    %vm1172 = vmor %vm1170, %vm1171
    %v1173 = vsel %vm1172, %v1165, %v1169
    %v1174 = vand.u32 2147483647, %v625
    %vm1175 = vcmp.eq.f32.partialorder %v1174, 8.507059e+37
    %v1176 = vand.u32 %v625, 2147483648
    %v1177 = vor.u32 1.1754944e-38, %v1176
    %v1178 = vsel %vm1175, %v1177, %v1173
    %v1179 = vmul.f32 1.0, %v1178
    %v1180 = vrcp.pop %v626
    %v1181 = vmul.f32 %v626, %v1180
    %v1182 = vsub.f32 1.0, %v1181
    %v1183 = vmul.f32 %v1180, %v1182
    %v1184 = vadd.f32 %v1180, %v1183
    %vm1185 = vweird.f32 %v626
    %vm1186 = vweird.f32 %v1180
    %vm1187 = vmor %vm1185, %vm1186
    %v1188 = vsel %vm1187, %v1180, %v1184
    %v1189 = vand.u32 2147483647, %v626
    %vm1190 = vcmp.eq.f32.partialorder %v1189, 8.507059e+37
    %v1191 = vand.u32 %v626, 2147483648
    %v1192 = vor.u32 1.1754944e-38, %v1191
    %v1193 = vsel %vm1190, %v1192, %v1188
    %v1194 = vmul.f32 1.0, %v1193
    %v1195 = vrcp.pop %v627
    %v1196 = vmul.f32 %v627, %v1195
    %v1197 = vsub.f32 1.0, %v1196
    %v1198 = vmul.f32 %v1195, %v1197
    %v1199 = vadd.f32 %v1195, %v1198
    %vm1200 = vweird.f32 %v627
    %vm1201 = vweird.f32 %v1195
    %vm1202 = vmor %vm1200, %vm1201
    %v1203 = vsel %vm1202, %v1195, %v1199
    %v1204 = vand.u32 2147483647, %v627
    %vm1205 = vcmp.eq.f32.partialorder %v1204, 8.507059e+37
    %v1206 = vand.u32 %v627, 2147483648
    %v1207 = vor.u32 1.1754944e-38, %v1206
    %v1208 = vsel %vm1205, %v1207, %v1203
    %v1209 = vmul.f32 1.0, %v1208
    %v1210 = vrcp.pop %v628
    %v1211 = vmul.f32 %v628, %v1210
    %v1212 = vsub.f32 1.0, %v1211
    %v1213 = vmul.f32 %v1210, %v1212
    %v1214 = vadd.f32 %v1210, %v1213
    %vm1215 = vweird.f32 %v628
    %vm1216 = vweird.f32 %v1210
    %vm1217 = vmor %vm1215, %vm1216
    %v1218 = vsel %vm1217, %v1210, %v1214
    %v1219 = vand.u32 2147483647, %v628
    %vm1220 = vcmp.eq.f32.partialorder %v1219, 8.507059e+37
    %v1221 = vand.u32 %v628, 2147483648
    %v1222 = vor.u32 1.1754944e-38, %v1221
    %v1223 = vsel %vm1220, %v1222, %v1218
    %v1224 = vmul.f32 1.0, %v1223
    %v1225 = vrcp.pop %v629
    %v1226 = vmul.f32 %v629, %v1225
    %v1227 = vsub.f32 1.0, %v1226
    %v1228 = vmul.f32 %v1225, %v1227
    %v1229 = vadd.f32 %v1225, %v1228
    %vm1230 = vweird.f32 %v629
    %vm1231 = vweird.f32 %v1225
    %vm1232 = vmor %vm1230, %vm1231
    %v1233 = vsel %vm1232, %v1225, %v1229
    %v1234 = vand.u32 2147483647, %v629
    %vm1235 = vcmp.eq.f32.partialorder %v1234, 8.507059e+37
    %v1236 = vand.u32 %v629, 2147483648
    %v1237 = vor.u32 1.1754944e-38, %v1236
    %v1238 = vsel %vm1235, %v1237, %v1233
    %v1239 = vmul.f32 1.0, %v1238
    %v1240 = vrcp.pop %v630
    %v1241 = vmul.f32 %v630, %v1240
    %v1242 = vsub.f32 1.0, %v1241
    %v1243 = vmul.f32 %v1240, %v1242
    %v1244 = vadd.f32 %v1240, %v1243
    %vm1245 = vweird.f32 %v630
    %vm1246 = vweird.f32 %v1240
    %vm1247 = vmor %vm1245, %vm1246
    %v1248 = vsel %vm1247, %v1240, %v1244
    %v1249 = vand.u32 2147483647, %v630
    %vm1250 = vcmp.eq.f32.partialorder %v1249, 8.507059e+37
    %v1251 = vand.u32 %v630, 2147483648
    %v1252 = vor.u32 1.1754944e-38, %v1251
    %v1253 = vsel %vm1250, %v1252, %v1248
    %v1254 = vmul.f32 1.0, %v1253
    %v1255 = vrcp.pop %v631
    %v1256 = vmul.f32 %v631, %v1255
    %v1257 = vsub.f32 1.0, %v1256
    %v1258 = vmul.f32 %v1255, %v1257
    %v1259 = vadd.f32 %v1255, %v1258
    %vm1260 = vweird.f32 %v631
    %vm1261 = vweird.f32 %v1255
    %vm1262 = vmor %vm1260, %vm1261
    %v1263 = vsel %vm1262, %v1255, %v1259
    %v1264 = vand.u32 2147483647, %v631
    %vm1265 = vcmp.eq.f32.partialorder %v1264, 8.507059e+37
    %v1266 = vand.u32 %v631, 2147483648
    %v1267 = vor.u32 1.1754944e-38, %v1266
    %v1268 = vsel %vm1265, %v1267, %v1263
    %v1269 = vmul.f32 1.0, %v1268
    %v1270 = vrcp.pop %v632
    %v1271 = vmul.f32 %v632, %v1270
    %v1272 = vsub.f32 1.0, %v1271
    %v1273 = vmul.f32 %v1270, %v1272
    %v1274 = vadd.f32 %v1270, %v1273
    %vm1275 = vweird.f32 %v632
    %vm1276 = vweird.f32 %v1270
    %vm1277 = vmor %vm1275, %vm1276
    %v1278 = vsel %vm1277, %v1270, %v1274
    %v1279 = vand.u32 2147483647, %v632
    %vm1280 = vcmp.eq.f32.partialorder %v1279, 8.507059e+37
    %v1281 = vand.u32 %v632, 2147483648
    %v1282 = vor.u32 1.1754944e-38, %v1281
    %v1283 = vsel %vm1280, %v1282, %v1278
    %v1284 = vmul.f32 1.0, %v1283
    %v1285 = vrcp.pop %v633
    %v1286 = vmul.f32 %v633, %v1285
    %v1287 = vsub.f32 1.0, %v1286
    %v1288 = vmul.f32 %v1285, %v1287
    %v1289 = vadd.f32 %v1285, %v1288
    %vm1290 = vweird.f32 %v633
    %vm1291 = vweird.f32 %v1285
    %vm1292 = vmor %vm1290, %vm1291
    %v1293 = vsel %vm1292, %v1285, %v1289
    %v1294 = vand.u32 2147483647, %v633
    %vm1295 = vcmp.eq.f32.partialorder %v1294, 8.507059e+37
    %v1296 = vand.u32 %v633, 2147483648
    %v1297 = vor.u32 1.1754944e-38, %v1296
    %v1298 = vsel %vm1295, %v1297, %v1293
    %v1299 = vmul.f32 1.0, %v1298
    %v1300 = vrcp.pop %v634
    %v1301 = vmul.f32 %v634, %v1300
    %v1302 = vsub.f32 1.0, %v1301
    %v1303 = vmul.f32 %v1300, %v1302
    %v1304 = vadd.f32 %v1300, %v1303
    %vm1305 = vweird.f32 %v634
    %vm1306 = vweird.f32 %v1300
    %vm1307 = vmor %vm1305, %vm1306
    %v1308 = vsel %vm1307, %v1300, %v1304
    %v1309 = vand.u32 2147483647, %v634
    %vm1310 = vcmp.eq.f32.partialorder %v1309, 8.507059e+37
    %v1311 = vand.u32 %v634, 2147483648
    %v1312 = vor.u32 1.1754944e-38, %v1311
    %v1313 = vsel %vm1310, %v1312, %v1308
    %v1314 = vmul.f32 1.0, %v1313
    %v1315 = vrcp.pop %v635
    %v1316 = vmul.f32 %v635, %v1315
    %v1317 = vsub.f32 1.0, %v1316
    %v1318 = vmul.f32 %v1315, %v1317
    %v1319 = vadd.f32 %v1315, %v1318
    %vm1320 = vweird.f32 %v635
    %vm1321 = vweird.f32 %v1315
    %vm1322 = vmor %vm1320, %vm1321
    %v1323 = vsel %vm1322, %v1315, %v1319
    %v1324 = vand.u32 2147483647, %v635
    %vm1325 = vcmp.eq.f32.partialorder %v1324, 8.507059e+37
    %v1326 = vand.u32 %v635, 2147483648
    %v1327 = vor.u32 1.1754944e-38, %v1326
    %v1328 = vsel %vm1325, %v1327, %v1323
    %v1329 = vmul.f32 1.0, %v1328
    %v1330 = vrcp.pop %v636
    %v1331 = vmul.f32 %v636, %v1330
    %v1332 = vsub.f32 1.0, %v1331
    %v1333 = vmul.f32 %v1330, %v1332
    %v1334 = vadd.f32 %v1330, %v1333
    %vm1335 = vweird.f32 %v636
    %vm1336 = vweird.f32 %v1330
    %vm1337 = vmor %vm1335, %vm1336
    %v1338 = vsel %vm1337, %v1330, %v1334
    %v1339 = vand.u32 2147483647, %v636
    %vm1340 = vcmp.eq.f32.partialorder %v1339, 8.507059e+37
    %v1341 = vand.u32 %v636, 2147483648
    %v1342 = vor.u32 1.1754944e-38, %v1341
    %v1343 = vsel %vm1340, %v1342, %v1338
    %v1344 = vmul.f32 1.0, %v1343
    %v1345 = vrcp.pop %v637
    %v1346 = vmul.f32 %v637, %v1345
    %v1347 = vsub.f32 1.0, %v1346
    %v1348 = vmul.f32 %v1345, %v1347
    %v1349 = vadd.f32 %v1345, %v1348
    %vm1350 = vweird.f32 %v637
    %vm1351 = vweird.f32 %v1345
    %vm1352 = vmor %vm1350, %vm1351
    %v1353 = vsel %vm1352, %v1345, %v1349
    %v1354 = vand.u32 2147483647, %v637
    %vm1355 = vcmp.eq.f32.partialorder %v1354, 8.507059e+37
    %v1356 = vand.u32 %v637, 2147483648
    %v1357 = vor.u32 1.1754944e-38, %v1356
    %v1358 = vsel %vm1355, %v1357, %v1353
    %v1359 = vmul.f32 1.0, %v1358
    %v1360 = vrcp.pop %v638
    %v1361 = vmul.f32 %v638, %v1360
    %v1362 = vsub.f32 1.0, %v1361
    %v1363 = vmul.f32 %v1360, %v1362
    %v1364 = vadd.f32 %v1360, %v1363
    %vm1365 = vweird.f32 %v638
    %vm1366 = vweird.f32 %v1360
    %vm1367 = vmor %vm1365, %vm1366
    %v1368 = vsel %vm1367, %v1360, %v1364
    %v1369 = vand.u32 2147483647, %v638
    %vm1370 = vcmp.eq.f32.partialorder %v1369, 8.507059e+37
    %v1371 = vand.u32 %v638, 2147483648
    %v1372 = vor.u32 1.1754944e-38, %v1371
    %v1373 = vsel %vm1370, %v1372, %v1368
    %v1374 = vmul.f32 1.0, %v1373
    %v1375 = vrcp.pop %v639
    %v1376 = vmul.f32 %v639, %v1375
    %v1377 = vsub.f32 1.0, %v1376
    %v1378 = vmul.f32 %v1375, %v1377
    %v1379 = vadd.f32 %v1375, %v1378
    %vm1380 = vweird.f32 %v639
    %vm1381 = vweird.f32 %v1375
    %vm1382 = vmor %vm1380, %vm1381
    %v1383 = vsel %vm1382, %v1375, %v1379
    %v1384 = vand.u32 2147483647, %v639
    %vm1385 = vcmp.eq.f32.partialorder %v1384, 8.507059e+37
    %v1386 = vand.u32 %v639, 2147483648
    %v1387 = vor.u32 1.1754944e-38, %v1386
    %v1388 = vsel %vm1385, %v1387, %v1383
    %v1389 = vmul.f32 1.0, %v1388
    %v1390 = vrcp.pop %v640
    %v1391 = vmul.f32 %v640, %v1390
    %v1392 = vsub.f32 1.0, %v1391
    %v1393 = vmul.f32 %v1390, %v1392
    %v1394 = vadd.f32 %v1390, %v1393
    %vm1395 = vweird.f32 %v640
    %vm1396 = vweird.f32 %v1390
    %vm1397 = vmor %vm1395, %vm1396
    %v1398 = vsel %vm1397, %v1390, %v1394
    %v1399 = vand.u32 2147483647, %v640
    %vm1400 = vcmp.eq.f32.partialorder %v1399, 8.507059e+37
    %v1401 = vand.u32 %v640, 2147483648
    %v1402 = vor.u32 1.1754944e-38, %v1401
    %v1403 = vsel %vm1400, %v1402, %v1398
    %v1404 = vmul.f32 1.0, %v1403
    %v1405 = vrcp.pop %v641
    %v1406 = vmul.f32 %v641, %v1405
    %v1407 = vsub.f32 1.0, %v1406
    %v1408 = vmul.f32 %v1405, %v1407
    %v1409 = vadd.f32 %v1405, %v1408
    %vm1410 = vweird.f32 %v641
    %vm1411 = vweird.f32 %v1405
    %vm1412 = vmor %vm1410, %vm1411
    %v1413 = vsel %vm1412, %v1405, %v1409
    %v1414 = vand.u32 2147483647, %v641
    %vm1415 = vcmp.eq.f32.partialorder %v1414, 8.507059e+37
    %v1416 = vand.u32 %v641, 2147483648
    %v1417 = vor.u32 1.1754944e-38, %v1416
    %v1418 = vsel %vm1415, %v1417, %v1413
    %v1419 = vmul.f32 1.0, %v1418
    %v1420 = vrcp.pop %v642
    %v1421 = vmul.f32 %v642, %v1420
    %v1422 = vsub.f32 1.0, %v1421
    %v1423 = vmul.f32 %v1420, %v1422
    %v1424 = vadd.f32 %v1420, %v1423
    %vm1425 = vweird.f32 %v642
    %vm1426 = vweird.f32 %v1420
    %vm1427 = vmor %vm1425, %vm1426
    %v1428 = vsel %vm1427, %v1420, %v1424
    %v1429 = vand.u32 2147483647, %v642
    %vm1430 = vcmp.eq.f32.partialorder %v1429, 8.507059e+37
    %v1431 = vand.u32 %v642, 2147483648
    %v1432 = vor.u32 1.1754944e-38, %v1431
    %v1433 = vsel %vm1430, %v1432, %v1428
    %v1434 = vmul.f32 1.0, %v1433
    %v1435 = vrcp.pop %v643
    %v1436 = vmul.f32 %v643, %v1435
    %v1437 = vsub.f32 1.0, %v1436
    %v1438 = vmul.f32 %v1435, %v1437
    %v1439 = vadd.f32 %v1435, %v1438
    %vm1440 = vweird.f32 %v643
    %vm1441 = vweird.f32 %v1435
    %vm1442 = vmor %vm1440, %vm1441
    %v1443 = vsel %vm1442, %v1435, %v1439
    %v1444 = vand.u32 2147483647, %v643
    %vm1445 = vcmp.eq.f32.partialorder %v1444, 8.507059e+37
    %v1446 = vand.u32 %v643, 2147483648
    %v1447 = vor.u32 1.1754944e-38, %v1446
    %v1448 = vsel %vm1445, %v1447, %v1443
    %v1449 = vmul.f32 1.0, %v1448
    %v1450 = vrcp.pop %v644
    %v1451 = vmul.f32 %v644, %v1450
    %v1452 = vsub.f32 1.0, %v1451
    %v1453 = vmul.f32 %v1450, %v1452
    %v1454 = vadd.f32 %v1450, %v1453
    %vm1455 = vweird.f32 %v644
    %vm1456 = vweird.f32 %v1450
    %vm1457 = vmor %vm1455, %vm1456
    %v1458 = vsel %vm1457, %v1450, %v1454
    %v1459 = vand.u32 2147483647, %v644
    %vm1460 = vcmp.eq.f32.partialorder %v1459, 8.507059e+37
    %v1461 = vand.u32 %v644, 2147483648
    %v1462 = vor.u32 1.1754944e-38, %v1461
    %v1463 = vsel %vm1460, %v1462, %v1458
    %v1464 = vmul.f32 1.0, %v1463
    %v1465 = vrcp.pop %v645
    %v1466 = vmul.f32 %v645, %v1465
    %v1467 = vsub.f32 1.0, %v1466
    %v1468 = vmul.f32 %v1465, %v1467
    %v1469 = vadd.f32 %v1465, %v1468
    %vm1470 = vweird.f32 %v645
    %vm1471 = vweird.f32 %v1465
    %vm1472 = vmor %vm1470, %vm1471
    %v1473 = vsel %vm1472, %v1465, %v1469
    %v1474 = vand.u32 2147483647, %v645
    %vm1475 = vcmp.eq.f32.partialorder %v1474, 8.507059e+37
    %v1476 = vand.u32 %v645, 2147483648
    %v1477 = vor.u32 1.1754944e-38, %v1476
    %v1478 = vsel %vm1475, %v1477, %v1473
    %v1479 = vmul.f32 1.0, %v1478
    %v1480 = vrcp.pop %v646
    %v1481 = vmul.f32 %v646, %v1480
    %v1482 = vsub.f32 1.0, %v1481
    %v1483 = vmul.f32 %v1480, %v1482
    %v1484 = vadd.f32 %v1480, %v1483
    %vm1485 = vweird.f32 %v646
    %vm1486 = vweird.f32 %v1480
    %vm1487 = vmor %vm1485, %vm1486
    %v1488 = vsel %vm1487, %v1480, %v1484
    %v1489 = vand.u32 2147483647, %v646
    %vm1490 = vcmp.eq.f32.partialorder %v1489, 8.507059e+37
    %v1491 = vand.u32 %v646, 2147483648
    %v1492 = vor.u32 1.1754944e-38, %v1491
    %v1493 = vsel %vm1490, %v1492, %v1488
    %v1494 = vmul.f32 1.0, %v1493
    %v1495 = vrcp.pop %v647
    %v1496 = vmul.f32 %v647, %v1495
    %v1497 = vsub.f32 1.0, %v1496
    %v1498 = vmul.f32 %v1495, %v1497
    %v1499 = vadd.f32 %v1495, %v1498
    %vm1500 = vweird.f32 %v647
    %vm1501 = vweird.f32 %v1495
    %vm1502 = vmor %vm1500, %vm1501
    %v1503 = vsel %vm1502, %v1495, %v1499
    %v1504 = vand.u32 2147483647, %v647
    %vm1505 = vcmp.eq.f32.partialorder %v1504, 8.507059e+37
    %v1506 = vand.u32 %v647, 2147483648
    %v1507 = vor.u32 1.1754944e-38, %v1506
    %v1508 = vsel %vm1505, %v1507, %v1503
    %v1509 = vmul.f32 1.0, %v1508
    %v1510 = vrcp.pop %v648
    %v1511 = vmul.f32 %v648, %v1510
    %v1512 = vsub.f32 1.0, %v1511
    %v1513 = vmul.f32 %v1510, %v1512
    %v1514 = vadd.f32 %v1510, %v1513
    %vm1515 = vweird.f32 %v648
    %vm1516 = vweird.f32 %v1510
    %vm1517 = vmor %vm1515, %vm1516
    %v1518 = vsel %vm1517, %v1510, %v1514
    %v1519 = vand.u32 2147483647, %v648
    %vm1520 = vcmp.eq.f32.partialorder %v1519, 8.507059e+37
    %v1521 = vand.u32 %v648, 2147483648
    %v1522 = vor.u32 1.1754944e-38, %v1521
    %v1523 = vsel %vm1520, %v1522, %v1518
    %v1524 = vmul.f32 1.0, %v1523
    %v1525 = vrcp.pop %v649
    %v1526 = vmul.f32 %v649, %v1525
    %v1527 = vsub.f32 1.0, %v1526
    %v1528 = vmul.f32 %v1525, %v1527
    %v1529 = vadd.f32 %v1525, %v1528
    %vm1530 = vweird.f32 %v649
    %vm1531 = vweird.f32 %v1525
    %vm1532 = vmor %vm1530, %vm1531
    %v1533 = vsel %vm1532, %v1525, %v1529
    %v1534 = vand.u32 2147483647, %v649
    %vm1535 = vcmp.eq.f32.partialorder %v1534, 8.507059e+37
    %v1536 = vand.u32 %v649, 2147483648
    %v1537 = vor.u32 1.1754944e-38, %v1536
    %v1538 = vsel %vm1535, %v1537, %v1533
    %v1539 = vmul.f32 1.0, %v1538
    %v1540 = vrcp.pop %v650
    %v1541 = vmul.f32 %v650, %v1540
    %v1542 = vsub.f32 1.0, %v1541
    %v1543 = vmul.f32 %v1540, %v1542
    %v1544 = vadd.f32 %v1540, %v1543
    %vm1545 = vweird.f32 %v650
    %vm1546 = vweird.f32 %v1540
    %vm1547 = vmor %vm1545, %vm1546
    %v1548 = vsel %vm1547, %v1540, %v1544
    %v1549 = vand.u32 2147483647, %v650
    %vm1550 = vcmp.eq.f32.partialorder %v1549, 8.507059e+37
    %v1551 = vand.u32 %v650, 2147483648
    %v1552 = vor.u32 1.1754944e-38, %v1551
    %v1553 = vsel %vm1550, %v1552, %v1548
    %v1554 = vmul.f32 1.0, %v1553
    %v1555 = vrcp.pop %v651
    %v1556 = vmul.f32 %v651, %v1555
    %v1557 = vsub.f32 1.0, %v1556
    %v1558 = vmul.f32 %v1555, %v1557
    %v1559 = vadd.f32 %v1555, %v1558
    %vm1560 = vweird.f32 %v651
    %vm1561 = vweird.f32 %v1555
    %vm1562 = vmor %vm1560, %vm1561
    %v1563 = vsel %vm1562, %v1555, %v1559
    %v1564 = vand.u32 2147483647, %v651
    %vm1565 = vcmp.eq.f32.partialorder %v1564, 8.507059e+37
    %v1566 = vand.u32 %v651, 2147483648
    %v1567 = vor.u32 1.1754944e-38, %v1566
    %v1568 = vsel %vm1565, %v1567, %v1563
    %v1569 = vmul.f32 1.0, %v1568
    %v1570 = vrcp.pop %v652
    %v1571 = vmul.f32 %v652, %v1570
    %v1572 = vsub.f32 1.0, %v1571
    %v1573 = vmul.f32 %v1570, %v1572
    %v1574 = vadd.f32 %v1570, %v1573
    %vm1575 = vweird.f32 %v652
    %vm1576 = vweird.f32 %v1570
    %vm1577 = vmor %vm1575, %vm1576
    %v1578 = vsel %vm1577, %v1570, %v1574
    %v1579 = vand.u32 2147483647, %v652
    %vm1580 = vcmp.eq.f32.partialorder %v1579, 8.507059e+37
    %v1581 = vand.u32 %v652, 2147483648
    %v1582 = vor.u32 1.1754944e-38, %v1581
    %v1583 = vsel %vm1580, %v1582, %v1578
    %v1584 = vmul.f32 1.0, %v1583
    %v1585 = vrcp.pop %v653
    %v1586 = vmul.f32 %v653, %v1585
    %v1587 = vsub.f32 1.0, %v1586
    %v1588 = vmul.f32 %v1585, %v1587
    %v1589 = vadd.f32 %v1585, %v1588
    %vm1590 = vweird.f32 %v653
    %vm1591 = vweird.f32 %v1585
    %vm1592 = vmor %vm1590, %vm1591
    %v1593 = vsel %vm1592, %v1585, %v1589
    %v1594 = vand.u32 2147483647, %v653
    %vm1595 = vcmp.eq.f32.partialorder %v1594, 8.507059e+37
    %v1596 = vand.u32 %v653, 2147483648
    %v1597 = vor.u32 1.1754944e-38, %v1596
    %v1598 = vsel %vm1595, %v1597, %v1593
    %v1599 = vmul.f32 1.0, %v1598
    %v1600 = vrcp.pop %v654
    %v1601 = vmul.f32 %v654, %v1600
    %v1602 = vsub.f32 1.0, %v1601
    %v1603 = vmul.f32 %v1600, %v1602
    %v1604 = vadd.f32 %v1600, %v1603
    %vm1605 = vweird.f32 %v654
    %vm1606 = vweird.f32 %v1600
    %vm1607 = vmor %vm1605, %vm1606
    %v1608 = vsel %vm1607, %v1600, %v1604
    %v1609 = vand.u32 2147483647, %v654
    %vm1610 = vcmp.eq.f32.partialorder %v1609, 8.507059e+37
    %v1611 = vand.u32 %v654, 2147483648
    %v1612 = vor.u32 1.1754944e-38, %v1611
    %v1613 = vsel %vm1610, %v1612, %v1608
    %v1614 = vmul.f32 1.0, %v1613
    %v1615 = vmul.f32 %v208, %v669
    %v1616 = vmul.f32 %v211, %v684
    %v1617 = vmul.f32 %v214, %v699
    %v1618 = vmul.f32 %v217, %v714
    %v1619 = vmul.f32 %v220, %v729
    %v1620 = vmul.f32 %v223, %v744
    %v1621 = vmul.f32 %v226, %v759
    %v1622 = vmul.f32 %v229, %v774
    %v1623 = vmul.f32 %v232, %v789
    %v1624 = vmul.f32 %v235, %v804
    %v1625 = vmul.f32 %v238, %v819
    %v1626 = vmul.f32 %v241, %v834
    %v1627 = vmul.f32 %v244, %v849
    %v1628 = vmul.f32 %v247, %v864
    %v1629 = vmul.f32 %v250, %v879
    %v1630 = vmul.f32 %v253, %v894
    %v1631 = vmul.f32 %v256, %v909
    %v1632 = vmul.f32 %v259, %v924
    %v1633 = vmul.f32 %v262, %v939
    %v1634 = vmul.f32 %v265, %v954
    %v1635 = vmul.f32 %v268, %v969
    %v1636 = vmul.f32 %v271, %v984
    %v1637 = vmul.f32 %v274, %v999
    %v1638 = vmul.f32 %v277, %v1014
    %v1639 = vmul.f32 %v280, %v1029
    %v1640 = vmul.f32 %v283, %v1044
    %v1641 = vmul.f32 %v286, %v1059
    %v1642 = vmul.f32 %v289, %v1074
    %v1643 = vmul.f32 %v292, %v1089
    %v1644 = vmul.f32 %v295, %v1104
    %v1645 = vmul.f32 %v298, %v1119
    %v1646 = vmul.f32 %v301, %v1134
    %v1647 = vmul.f32 %v304, %v1149
    %v1648 = vmul.f32 %v307, %v1164
    %v1649 = vmul.f32 %v310, %v1179
    %v1650 = vmul.f32 %v313, %v1194
    %v1651 = vmul.f32 %v316, %v1209
    %v1652 = vmul.f32 %v319, %v1224
    %v1653 = vmul.f32 %v322, %v1239
    %v1654 = vmul.f32 %v325, %v1254
    %v1655 = vmul.f32 %v328, %v1269
    %v1656 = vmul.f32 %v331, %v1284
    %v1657 = vmul.f32 %v334, %v1299
    %v1658 = vmul.f32 %v337, %v1314
    %v1659 = vmul.f32 %v340, %v1329
    %v1660 = vmul.f32 %v343, %v1344
    %v1661 = vmul.f32 %v346, %v1359
    %v1662 = vmul.f32 %v349, %v1374
    %v1663 = vmul.f32 %v352, %v1389
    %v1664 = vmul.f32 %v355, %v1404
    %v1665 = vmul.f32 %v358, %v1419
    %v1666 = vmul.f32 %v361, %v1434
    %v1667 = vmul.f32 %v364, %v1449
    %v1668 = vmul.f32 %v367, %v1464
    %v1669 = vmul.f32 %v370, %v1479
    %v1670 = vmul.f32 %v373, %v1494
    %v1671 = vmul.f32 %v376, %v1509
    %v1672 = vmul.f32 %v379, %v1524
    %v1673 = vmul.f32 %v382, %v1539
    %v1674 = vmul.f32 %v385, %v1554
    %v1675 = vmul.f32 %v388, %v1569
    %v1676 = vmul.f32 %v391, %v1584
    %v1677 = vmul.f32 %v394, %v1599
    %v1678 = vmul.f32 %v397, %v1614
    %v1679 = vld [vmem:[#allocation5] sm:$0xff]
    %1681 = vst [vmem:[#allocation1] ss:$4 sm:$0xff] %v1679
    %v1682 = vld.sshfl [vmem:[#allocation1] sm:$0xff pattern:$0x73625140]
    %v1683 = vld.sshfl [vmem:[#allocation1 + $0x8] sm:$0xff pattern:$0x73625140]
    %v1684 = vld.sshfl [vmem:[#allocation1 + $0x10] sm:$0xff pattern:$0x73625140]
    %v1685 = vld.sshfl [vmem:[#allocation1 + $0x18] sm:$0xff pattern:$0x73625140]
    %1690 = vmatpush.msra.mxu0 %v1630
    %1691 = vmatpush.msra.mxu0 %v1629
    %1692 = vmatpush.msra.mxu0 %v1628
    %1693 = vmatpush.msra.mxu0 %v1627
    %1694 = vmatpush.msra.mxu0 %v1626
    %1695 = vmatpush.msra.mxu0 %v1625
    %1696 = vmatpush.msra.mxu0 %v1624
    %1697 = vmatpush.msra.mxu0 %v1623
    %1698 = vmatpush.msra.mxu0 %v1622
    %1699 = vmatpush.msra.mxu0 %v1621
    %1700 = vmatpush.msra.mxu0 %v1620
    %1701 = vmatpush.msra.mxu0 %v1619
    %1702 = vmatpush.msra.mxu0 %v1618
    %1703 = vmatpush.msra.mxu0 %v1617
    %1704 = vmatpush.msra.mxu0 %v1616
    %1705 = vmatpush.msra.mxu0 %v1615
    %1706 = vmatmul.f32.gmra.mxu0 %v1682
    %v1707 = vpop.f32.mrf.mxu0
    %v1708 = vadd.f32 0.0, %v1707
    %1709 = vdwg.mxu0
    %1710 = vmatpush.msra.mxu0 %v1646
    %1711 = vmatpush.msra.mxu0 %v1645
    %1712 = vmatpush.msra.mxu0 %v1644
    %1713 = vmatpush.msra.mxu0 %v1643
    %1714 = vmatpush.msra.mxu0 %v1642
    %1715 = vmatpush.msra.mxu0 %v1641
    %1716 = vmatpush.msra.mxu0 %v1640
    %1717 = vmatpush.msra.mxu0 %v1639
    %1718 = vmatpush.msra.mxu0 %v1638
    %1719 = vmatpush.msra.mxu0 %v1637
    %1720 = vmatpush.msra.mxu0 %v1636
    %1721 = vmatpush.msra.mxu0 %v1635
    %1722 = vmatpush.msra.mxu0 %v1634
    %1723 = vmatpush.msra.mxu0 %v1633
    %1724 = vmatpush.msra.mxu0 %v1632
    %1725 = vmatpush.msra.mxu0 %v1631
    %1726 = vmatmul.f32.gmra.mxu0 %v1683
    %v1727 = vpop.f32.mrf.mxu0
    %v1728 = vadd.f32 %v1708, %v1727
    %1729 = vdwg.mxu0
    %1730 = vmatpush.msra.mxu0 %v1662
    %1731 = vmatpush.msra.mxu0 %v1661
    %1732 = vmatpush.msra.mxu0 %v1660
    %1733 = vmatpush.msra.mxu0 %v1659
    %1734 = vmatpush.msra.mxu0 %v1658
    %1735 = vmatpush.msra.mxu0 %v1657
    %1736 = vmatpush.msra.mxu0 %v1656
    %1737 = vmatpush.msra.mxu0 %v1655
    %1738 = vmatpush.msra.mxu0 %v1654
    %1739 = vmatpush.msra.mxu0 %v1653
    %1740 = vmatpush.msra.mxu0 %v1652
    %1741 = vmatpush.msra.mxu0 %v1651
    %1742 = vmatpush.msra.mxu0 %v1650
    %1743 = vmatpush.msra.mxu0 %v1649
    %1744 = vmatpush.msra.mxu0 %v1648
    %1745 = vmatpush.msra.mxu0 %v1647
    %1746 = vmatmul.f32.gmra.mxu0 %v1684
    %v1747 = vpop.f32.mrf.mxu0
    %v1748 = vadd.f32 %v1728, %v1747
    %1749 = vdwg.mxu0
    %1750 = vmatpush.msra.mxu0 %v1678
    %1751 = vmatpush.msra.mxu0 %v1677
    %1752 = vmatpush.msra.mxu0 %v1676
    %1753 = vmatpush.msra.mxu0 %v1675
    %1754 = vmatpush.msra.mxu0 %v1674
    %1755 = vmatpush.msra.mxu0 %v1673
    %1756 = vmatpush.msra.mxu0 %v1672
    %1757 = vmatpush.msra.mxu0 %v1671
    %1758 = vmatpush.msra.mxu0 %v1670
    %1759 = vmatpush.msra.mxu0 %v1669
    %1760 = vmatpush.msra.mxu0 %v1668
    %1761 = vmatpush.msra.mxu0 %v1667
    %1762 = vmatpush.msra.mxu0 %v1666
    %1763 = vmatpush.msra.mxu0 %v1665
    %1764 = vmatpush.msra.mxu0 %v1664
    %1765 = vmatpush.msra.mxu0 %v1663
    %1766 = vmatmul.f32.gmra.mxu0 %v1685
    %v1767 = vpop.f32.mrf.mxu0
    %v1768 = vadd.f32 %v1748, %v1767
    %1769 = vdwg.mxu0
    %v1770 = vld [vmem:[#allocation8] sm:$0xff]
    %v1771 = vld [vmem:[#allocation8 + $0x8] sm:$0xff]
    %v1772 = vld [vmem:[#allocation8 + $0x10] sm:$0xff]
    %v1773 = vld [vmem:[#allocation8 + $0x18] sm:$0xff]
    %v1774 = vld [vmem:[#allocation8 + $0x20] sm:$0xff]
    %v1775 = vld [vmem:[#allocation8 + $0x28] sm:$0xff]
    %v1776 = vld [vmem:[#allocation8 + $0x30] sm:$0xff]
    %v1777 = vld [vmem:[#allocation8 + $0x38] sm:$0xff]
    %v1778 = vld [vmem:[#allocation8 + $0x40] sm:$0xff]
    %v1779 = vld [vmem:[#allocation8 + $0x48] sm:$0xff]
    %v1780 = vld [vmem:[#allocation8 + $0x50] sm:$0xff]
    %v1781 = vld [vmem:[#allocation8 + $0x58] sm:$0xff]
    %v1782 = vld [vmem:[#allocation8 + $0x60] sm:$0xff]
    %v1783 = vld [vmem:[#allocation8 + $0x68] sm:$0xff]
    %v1784 = vld [vmem:[#allocation8 + $0x70] sm:$0xff]
    %v1785 = vld [vmem:[#allocation8 + $0x78] sm:$0xff]
    %v1786 = vld [vmem:[%s5] sm:$0x1]
    %v1788 = vperm.slane %v1786, 0
    %1790 = vmatpush.msra.mxu0 %v1785
    %1791 = vmatpush.msra.mxu0 %v1784
    %1792 = vmatpush.msra.mxu0 %v1783
    %1793 = vmatpush.msra.mxu0 %v1782
    %1794 = vmatpush.msra.mxu0 %v1781
    %1795 = vmatpush.msra.mxu0 %v1780
    %1796 = vmatpush.msra.mxu0 %v1779
    %1797 = vmatpush.msra.mxu0 %v1778
    %1798 = vmatpush.msra.mxu0 %v1777
    %1799 = vmatpush.msra.mxu0 %v1776
    %1800 = vmatpush.msra.mxu0 %v1775
    %1801 = vmatpush.msra.mxu0 %v1774
    %1802 = vmatpush.msra.mxu0 %v1773
    %1803 = vmatpush.msra.mxu0 %v1772
    %1804 = vmatpush.msra.mxu0 %v1771
    %1805 = vmatpush.msra.mxu0 %v1770
    %1806 = vmatmul.f32.gmra.mxu0 %v1768
    %v1807 = vpop.f32.mrf.mxu0
    %v1808 = vadd.f32 %v1788, %v1807
    %1809 = vdwg.mxu0
    %v1810 = vxor.u32 %v1808, 2147483648
    %v1811 = vmul.f32 %v1810, 1.442695
    %v1812 = vpow.pop %v1811
    %v1813 = vadd.f32 %v1812, 1.0
    %v1814 = vrcp.pop %v1813
    %v1815 = vmul.f32 %v1813, %v1814
    %v1816 = vsub.f32 1.0, %v1815
    %v1817 = vmul.f32 %v1814, %v1816
    %v1818 = vadd.f32 %v1814, %v1817
    %vm1819 = vweird.f32 %v1813
    %vm1820 = vweird.f32 %v1814
    %vm1821 = vmor %vm1819, %vm1820
    %v1822 = vsel %vm1821, %v1814, %v1818
    %v1823 = vand.u32 2147483647, %v1813
    %vm1824 = vcmp.eq.f32.partialorder %v1823, 8.507059e+37
    %v1825 = vand.u32 %v1813, 2147483648
    %v1826 = vor.u32 1.1754944e-38, %v1825
    %v1827 = vsel %vm1824, %v1826, %v1822
    %v1828 = vmul.f32 1.0, %v1827
    %v1829 = vmul.f32 %v1808, %v1828
    %v1830 = vld [vmem:[#allocation10] sm:$0xff]
    %v1831 = vld [vmem:[#allocation10 + $0x8] sm:$0xff]
    %v1832 = vld [vmem:[#allocation10 + $0x10] sm:$0xff]
    %v1833 = vld [vmem:[#allocation10 + $0x18] sm:$0xff]
    %v1834 = vld [vmem:[#allocation10 + $0x20] sm:$0xff]
    %v1835 = vld [vmem:[#allocation10 + $0x28] sm:$0xff]
    %v1836 = vld [vmem:[#allocation10 + $0x30] sm:$0xff]
    %v1837 = vld [vmem:[#allocation10 + $0x38] sm:$0xff]
    %v1838 = vld [vmem:[#allocation10 + $0x40] sm:$0xff]
    %v1839 = vld [vmem:[#allocation10 + $0x48] sm:$0xff]
    %v1840 = vld [vmem:[#allocation10 + $0x50] sm:$0xff]
    %v1841 = vld [vmem:[#allocation10 + $0x58] sm:$0xff]
    %v1842 = vld [vmem:[#allocation10 + $0x60] sm:$0xff]
    %v1843 = vld [vmem:[#allocation10 + $0x68] sm:$0xff]
    %v1844 = vld [vmem:[#allocation10 + $0x70] sm:$0xff]
    %v1845 = vld [vmem:[#allocation10 + $0x78] sm:$0xff]
    %v1846 = vld [vmem:[%s7] sm:$0x1]
    %v1848 = vperm.slane %v1846, 0
    %1850 = vmatpush.msra.mxu0 %v1845
    %1851 = vmatpush.msra.mxu0 %v1844
    %1852 = vmatpush.msra.mxu0 %v1843
    %1853 = vmatpush.msra.mxu0 %v1842
    %1854 = vmatpush.msra.mxu0 %v1841
    %1855 = vmatpush.msra.mxu0 %v1840
    %1856 = vmatpush.msra.mxu0 %v1839
    %1857 = vmatpush.msra.mxu0 %v1838
    %1858 = vmatpush.msra.mxu0 %v1837
    %1859 = vmatpush.msra.mxu0 %v1836
    %1860 = vmatpush.msra.mxu0 %v1835
    %1861 = vmatpush.msra.mxu0 %v1834
    %1862 = vmatpush.msra.mxu0 %v1833
    %1863 = vmatpush.msra.mxu0 %v1832
    %1864 = vmatpush.msra.mxu0 %v1831
    %1865 = vmatpush.msra.mxu0 %v1830
    %1866 = vmatmul.f32.gmra.mxu0 %v1829
    %v1867 = vpop.f32.mrf.mxu0
    %v1868 = vadd.f32 %v1848, %v1867
    %1869 = vdwg.mxu0
    %1870 = vst [vmem:[#allocation11] sm:$0x3] %v1868
    // Predicated region
    $region54: #{tpu_custom_call.1} parent=1 // pred_check
      _
    $region55: #{tpu_custom_call.1} parent=1 // pred_check_branch
      %1872 = sbr.rel (0) target = $region57
    $region56: #{tpu_custom_call.1} parent=1 // pred_region
      %1874 = vsyncadd [#allocation4], 0
      %s1876 = sshll.u32 [#allocation11], 4
      %s1877 = int_to_ptr.vmem [resolvable:$true] %s1876
      %s1878 = sshll.u32 %s8, 4
      %s1879 = int_to_ptr.hbm [resolvable:$true] %s1878
      %1881 = dma.vmem_to_hbm [thread:$0]  %s1877, 32, %s1879, [#allocation4]
    $region57: #{tpu_custom_call.1} parent=1 // pred_fallthru
      _
    // Predicated region
    $region58: #{tpu_custom_call.1} parent=1 // pred_check
      _
    $region59: #{tpu_custom_call.1} parent=1 // pred_check_branch
      %1883 = sbr.rel (0) target = $region61
    $region60: #{tpu_custom_call.1} parent=1 // pred_region
      %1885 = dma.done [#allocation4], 32
    $region61: #{tpu_custom_call.1} parent=1 // pred_fallthru
      _
    %1886 = vsyncpa [#allocation3], 1
    %1887 = vsyncpa [#allocation6], 1
    %1888 = vsyncpa [#allocation9], 1
    %1889 = vsyncpa [#allocation4], 1

</llo_original>
